<compile_context>
chip_gen: v7x
topology: tpu7x:2x2x1
jax: 0.10.0
libtpu: 0.0.40
codegen_flags: <defaults>
</compile_context>

<pallas_src>
import jax
import jax.numpy as jnp
from jax import lax
from jax.experimental import pallas as pl
from jax.experimental.pallas import tpu as pltpu

# ---- small, module-consistent hyperparameters ----
B, N, C = 2, 8, 32            # batch, tokens, embed dim
BN = B * N                    # flattened token axis processed in one shot
NUM_HEADS = 4
HEAD_DIM = C // NUM_HEADS     # 8
MLP_RATIO = 4.0
MLP_HIDDEN = int(C * MLP_RATIO)   # 128
SCALE = HEAD_DIM ** -0.5          # qk_scale default
EPS = 1e-5                        # nn.LayerNorm default eps

W_IN_COLS = 3 * C + C + MLP_HIDDEN   # 256 : [qkv head-major | wproj | w_fc1]
VEC_ROWS, VEC_COLS = 8, 128          # packed small params (g1,be1,g2,be2,bp,b2,b1)


def _layernorm(x, gamma, beta):
    mean = jnp.mean(x, axis=-1, keepdims=True)
    var = jnp.mean((x - mean) ** 2, axis=-1, keepdims=True)  # biased, like torch LN
    return (x - mean) * lax.rsqrt(var + EPS) * gamma + beta


def _gelu(x):
    # exact (erf-based) GELU, matching torch.nn.GELU() default
    return 0.5 * x * (1.0 + lax.erf(x * (2.0 ** -0.5)))


def block_kernel(x_ref, w_in_ref, w2_ref, vec_ref, mask_ref, o_ref):
    x = x_ref[...]                         # (B*N, C) f32
    mask = mask_ref[...]                   # (B*N, B*N) additive block-diag mask

    # unpack small params (static slices off the packed (8,128) array)
    g1  = vec_ref[0:1, :C]
    be1 = vec_ref[1:2, :C]
    g2  = vec_ref[2:3, :C]
    be2 = vec_ref[3:4, :C]
    bp  = vec_ref[4:5, :C]
    b2  = vec_ref[5:6, :C]
    b1  = vec_ref[6:7, :MLP_HIDDEN]

    # ---- x + Attention(norm1(x)) ----
    xn = _layernorm(x, g1, be1)

    # fused QKV projection: one (BN, C) @ (C, 3C) matmul, columns head-major
    wqkv = w_in_ref[:, :3 * C]
    qkv = jnp.dot(xn, wqkv, preferred_element_type=jnp.float32)   # (BN, 3C)

    # per-head attention with the output projection folded into the loop:
    #   acc += (softmax(q k^T) v) @ wp_rows_for_head  -- no concatenate/relayout
    acc = jnp.zeros((BN, C), jnp.float32)
    for h in range(NUM_HEADS):
        base = h * 3 * HEAD_DIM                      # contiguous 24-lane band
        qh = qkv[:, base:base + HEAD_DIM]
        kh = qkv[:, base + HEAD_DIM:base + 2 * HEAD_DIM]
        vh = qkv[:, base + 2 * HEAD_DIM:base + 3 * HEAD_DIM]
        # q @ k^T without an explicit transpose: contract last dims of both
        s = lax.dot_general(qh, kh, (((1,), (1,)), ((), ())),
                            preferred_element_type=jnp.float32) * SCALE + mask
        m = jnp.max(s, axis=-1, keepdims=True)
        e = jnp.exp(s - m)
        p = e * pl.reciprocal(jnp.sum(e, axis=-1, keepdims=True), approx=True)
        # attn_drop: identity (eval)
        head = jnp.dot(p, vh, preferred_element_type=jnp.float32)        # (BN, hd)
        wp_h = w_in_ref[h * HEAD_DIM:(h + 1) * HEAD_DIM, 3 * C:4 * C]    # (hd, C)
        acc = acc + jnp.dot(head, wp_h, preferred_element_type=jnp.float32)

    # proj bias; proj_drop / drop_path1: identity (eval)
    x1 = x + acc + bp

    # ---- x1 + Mlp(norm2(x1)) ----
    xn2 = _layernorm(x1, g2, be2)
    w1 = w_in_ref[:, 4 * C:4 * C + MLP_HIDDEN]
    h1 = jnp.dot(xn2, w1, preferred_element_type=jnp.float32) + b1
    h1 = _gelu(h1)
    h2 = jnp.dot(h1, w2_ref[...], preferred_element_type=jnp.float32) + b2
    # drop / drop_path2: identity (eval)
    o_ref[...] = (x1 + h2).astype(o_ref.dtype)


def _pack_params(p):
    # QKV columns packed HEAD-MAJOR: [q_h0|k_h0|v_h0|q_h1|k_h1|v_h1|...]
    blocks = []
    for h in range(NUM_HEADS):
        lo = h * HEAD_DIM
        blocks += [p["wq"][:, lo:lo + HEAD_DIM],
                   p["wk"][:, lo:lo + HEAD_DIM],
                   p["wv"][:, lo:lo + HEAD_DIM]]
    wqkv = jnp.concatenate(blocks, axis=1)                    # (C, 3C)
    w_in = jnp.concatenate([wqkv, p["wp"], p["w1"]], axis=1)  # (C, 256)

    vecs = jnp.zeros((VEC_ROWS, VEC_COLS), jnp.float32)
    vecs = vecs.at[0, :C].set(p["g1"])
    vecs = vecs.at[1, :C].set(p["be1"])
    vecs = vecs.at[2, :C].set(p["g2"])
    vecs = vecs.at[3, :C].set(p["be2"])
    vecs = vecs.at[4, :C].set(p["bp"])
    vecs = vecs.at[5, :C].set(p["b2"])
    vecs = vecs.at[6, :MLP_HIDDEN].set(p["b1"])
    return w_in, p["w2"], vecs


def _block_diag_mask():
    # tokens only attend within their own batch element (compile-time constant)
    row_b = jnp.arange(BN, dtype=jnp.int32) // N
    return jnp.where(row_b[:, None] == row_b[None, :], 0.0, -1e30).astype(jnp.float32)


def vit_block(x, params):
    w_in, w2, vecs = _pack_params(params)
    mask = _block_diag_mask()
    x2d = x.reshape(BN, C)                 # free wrapper-side reshape

    vmem_spec = pl.BlockSpec(memory_space=pltpu.MemorySpace.VMEM)
    out2d = pl.pallas_call(
        block_kernel,
        out_shape=jax.ShapeDtypeStruct((BN, C), jnp.float32),
        in_specs=[vmem_spec] * 5,          # gridless: whole arrays live in VMEM
        out_specs=vmem_spec,
        cost_estimate=pl.CostEstimate(
            flops=430_000, transcendentals=3_200, bytes_accessed=58_368),
    )(x2d, w_in, w2, vecs, mask)
    return out2d.reshape(B, N, C)


def init_params(key):
    ks = jax.random.split(key, 8)
    s = 0.02
    return dict(
        g1=jnp.ones((C,), jnp.float32), be1=jnp.zeros((C,), jnp.float32),
        g2=jnp.ones((C,), jnp.float32), be2=jnp.zeros((C,), jnp.float32),
        # Attention: qkv has no bias (qkv_bias=False default); proj has bias.
        wq=s * jax.random.normal(ks[0], (C, C), jnp.float32),
        wk=s * jax.random.normal(ks[1], (C, C), jnp.float32),
        wv=s * jax.random.normal(ks[2], (C, C), jnp.float32),
        wp=s * jax.random.normal(ks[3], (C, C), jnp.float32),
        bp=s * jax.random.normal(ks[4], (C,), jnp.float32),
        # MLP
        w1=s * jax.random.normal(ks[5], (C, MLP_HIDDEN), jnp.float32),
        b1=s * jax.random.normal(ks[6], (MLP_HIDDEN,), jnp.float32),
        w2=s * jax.random.normal(ks[7], (MLP_HIDDEN, C), jnp.float32),
        b2=jnp.zeros((C,), jnp.float32),
    )


def reference(x, p):
    """Pure-JAX reference mirroring the PyTorch forward (eval mode)."""
    def ln(t, g, b):
        mu = jnp.mean(t, -1, keepdims=True)
        va = jnp.mean((t - mu) ** 2, -1, keepdims=True)
        return (t - mu) / jnp.sqrt(va + EPS) * g + b

    xn = ln(x, p["g1"], p["be1"])
    q = (xn @ p["wq"]).reshape(B, N, NUM_HEADS, HEAD_DIM).transpose(0, 2, 1, 3)
    k = (xn @ p["wk"]).reshape(B, N, NUM_HEADS, HEAD_DIM).transpose(0, 2, 1, 3)
    v = (xn @ p["wv"]).reshape(B, N, NUM_HEADS, HEAD_DIM).transpose(0, 2, 1, 3)
    attn = jax.nn.softmax((q @ jnp.swapaxes(k, -2, -1)) * SCALE, axis=-1)
    o = (attn @ v).transpose(0, 2, 1, 3).reshape(B, N, C)
    x1 = x + (o @ p["wp"] + p["bp"])
    xn2 = ln(x1, p["g2"], p["be2"])
    h = jax.nn.gelu(xn2 @ p["w1"] + p["b1"], approximate=False)
    return x1 + (h @ p["w2"] + p["b2"])


if __name__ == "__main__":
    key = jax.random.PRNGKey(0)
    kx, kp = jax.random.split(key)
    x = jax.random.normal(kx, (B, N, C), jnp.float32)
    params = init_params(kp)

    out = vit_block(x, params)
    out = jax.block_until_ready(out)

    ref = reference(x, params)
    assert out.shape == (B, N, C)
    # slightly relaxed vs f32-exact reference to absorb the approx-reciprocal softmax
    assert jnp.allclose(out, ref, atol=2e-4, rtol=2e-4), "mismatch vs JAX reference"
    print("KERNEL_OK")
</pallas_src>

<mosaic_0001>
module attributes {stable_mosaic.version = 11 : i64} {
  func.func @block_kernel(%arg0: memref<16x32xf32, #tpu.memory_space<vmem>>, %arg1: memref<32x256xf32, #tpu.memory_space<vmem>>, %arg2: memref<128x32xf32, #tpu.memory_space<vmem>>, %arg3: memref<8x128xf32, #tpu.memory_space<vmem>>, %arg4: memref<16x16xf32, #tpu.memory_space<vmem>>, %arg5: memref<16x32xf32, #tpu.memory_space<vmem>>) attributes {dimension_semantics = [], scalar_prefetch = 0 : i64, scratch_operands = 0 : i64, tpu.core_type = #tpu.core_type<tc>} {
    %c0 = arith.constant 0 : index
    %c0_0 = arith.constant 0 : index
    %0 = vector.load %arg0[%c0, %c0_0] : memref<16x32xf32, #tpu.memory_space<vmem>>, vector<16x32xf32>
    %c0_1 = arith.constant 0 : index
    %c0_2 = arith.constant 0 : index
    %1 = vector.load %arg4[%c0_1, %c0_2] : memref<16x16xf32, #tpu.memory_space<vmem>>, vector<16x16xf32>
    %c0_3 = arith.constant 0 : index
    %c0_4 = arith.constant 0 : index
    %2 = vector.load %arg3[%c0_3, %c0_4] : memref<8x128xf32, #tpu.memory_space<vmem>>, vector<1x32xf32>
    %c1 = arith.constant 1 : index
    %c0_5 = arith.constant 0 : index
    %3 = vector.load %arg3[%c1, %c0_5] : memref<8x128xf32, #tpu.memory_space<vmem>>, vector<1x32xf32>
    %c2 = arith.constant 2 : index
    %c0_6 = arith.constant 0 : index
    %4 = vector.load %arg3[%c2, %c0_6] : memref<8x128xf32, #tpu.memory_space<vmem>>, vector<1x32xf32>
    %c3 = arith.constant 3 : index
    %c0_7 = arith.constant 0 : index
    %5 = vector.load %arg3[%c3, %c0_7] : memref<8x128xf32, #tpu.memory_space<vmem>>, vector<1x32xf32>
    %c4 = arith.constant 4 : index
    %c0_8 = arith.constant 0 : index
    %6 = vector.load %arg3[%c4, %c0_8] : memref<8x128xf32, #tpu.memory_space<vmem>>, vector<1x32xf32>
    %c5 = arith.constant 5 : index
    %c0_9 = arith.constant 0 : index
    %7 = vector.load %arg3[%c5, %c0_9] : memref<8x128xf32, #tpu.memory_space<vmem>>, vector<1x32xf32>
    %c6 = arith.constant 6 : index
    %c0_10 = arith.constant 0 : index
    %8 = vector.load %arg3[%c6, %c0_10] : memref<8x128xf32, #tpu.memory_space<vmem>>, vector<1x128xf32>
    %cst = arith.constant dense<0.000000e+00> : vector<16xf32>
    %9 = vector.multi_reduction <add>, %0, %cst [1] : vector<16x32xf32> to vector<16xf32>
    %10 = vector.shape_cast %9 : vector<16xf32> to vector<16x1xf32>
    %cst_11 = arith.constant 3.200000e+01 : f32
    %11 = vector.broadcast %cst_11 : f32 to vector<16x1xf32>
    %12 = arith.divf %10, %11 : vector<16x1xf32>
    %13 = vector.broadcast %12 : vector<16x1xf32> to vector<16x32xf32>
    %14 = arith.subf %0, %13 : vector<16x32xf32>
    %15 = arith.mulf %14, %14 : vector<16x32xf32>
    %cst_12 = arith.constant dense<0.000000e+00> : vector<16xf32>
    %16 = vector.multi_reduction <add>, %15, %cst_12 [1] : vector<16x32xf32> to vector<16xf32>
    %17 = vector.shape_cast %16 : vector<16xf32> to vector<16x1xf32>
    %cst_13 = arith.constant 3.200000e+01 : f32
    %18 = vector.broadcast %cst_13 : f32 to vector<16x1xf32>
    %19 = arith.divf %17, %18 : vector<16x1xf32>
    %20 = vector.broadcast %12 : vector<16x1xf32> to vector<16x32xf32>
    %21 = arith.subf %0, %20 : vector<16x32xf32>
    %cst_14 = arith.constant 9.99999974E-6 : f32
    %22 = vector.broadcast %cst_14 : f32 to vector<16x1xf32>
    %23 = arith.addf %19, %22 : vector<16x1xf32>
    %24 = math.rsqrt %23 : vector<16x1xf32>
    %25 = vector.broadcast %24 : vector<16x1xf32> to vector<16x32xf32>
    %26 = arith.mulf %21, %25 : vector<16x32xf32>
    %27 = vector.broadcast %2 : vector<1x32xf32> to vector<16x32xf32>
    %28 = arith.mulf %26, %27 : vector<16x32xf32>
    %29 = vector.broadcast %3 : vector<1x32xf32> to vector<16x32xf32>
    %30 = arith.addf %28, %29 : vector<16x32xf32>
    %c0_15 = arith.constant 0 : index
    %c0_16 = arith.constant 0 : index
    %31 = vector.load %arg1[%c0_15, %c0_16] : memref<32x256xf32, #tpu.memory_space<vmem>>, vector<32x96xf32>
    %cst_17 = arith.constant dense<0.000000e+00> : vector<16x96xf32>
    %32 = tpu.matmul %30, %31, %cst_17 {dimension_numbers = #tpu.dot_dimension_numbers<[1], [0], [0], [1], [0, 0, 1, 1], [], []>} : vector<16x32xf32>, vector<32x96xf32>, vector<16x96xf32> -> vector<16x96xf32>
    %cst_18 = arith.constant 0.000000e+00 : f32
    %33 = vector.broadcast %cst_18 : f32 to vector<16x32xf32>
    %34 = vector.extract_strided_slice %32 {offsets = [0, 0], sizes = [16, 8], strides = [1, 1]} : vector<16x96xf32> to vector<16x8xf32>
    %35 = vector.extract_strided_slice %32 {offsets = [0, 8], sizes = [16, 8], strides = [1, 1]} : vector<16x96xf32> to vector<16x8xf32>
    %36 = vector.extract_strided_slice %32 {offsets = [0, 16], sizes = [16, 8], strides = [1, 1]} : vector<16x96xf32> to vector<16x8xf32>
    %cst_19 = arith.constant dense<0.000000e+00> : vector<16x16xf32>
    %37 = tpu.matmul %34, %35, %cst_19 {dimension_numbers = #tpu.dot_dimension_numbers<[1], [1], [0], [0], [0, 0, 1, 0], [], []>} : vector<16x8xf32>, vector<16x8xf32>, vector<16x16xf32> -> vector<16x16xf32>
    %cst_20 = arith.constant 0.353553385 : f32
    %38 = vector.broadcast %cst_20 : f32 to vector<16x16xf32>
    %39 = arith.mulf %37, %38 : vector<16x16xf32>
    %40 = arith.addf %39, %1 : vector<16x16xf32>
    %cst_21 = arith.constant dense<0xFF800000> : vector<16xf32>
    %41 = vector.multi_reduction <maximumf>, %40, %cst_21 [1] : vector<16x16xf32> to vector<16xf32>
    %42 = vector.shape_cast %41 : vector<16xf32> to vector<16x1xf32>
    %43 = vector.broadcast %42 : vector<16x1xf32> to vector<16x16xf32>
    %44 = arith.subf %40, %43 : vector<16x16xf32>
    %45 = math.exp %44 : vector<16x16xf32>
    %cst_22 = arith.constant dense<0.000000e+00> : vector<16xf32>
    %46 = vector.multi_reduction <add>, %45, %cst_22 [1] : vector<16x16xf32> to vector<16xf32>
    %47 = vector.shape_cast %46 : vector<16xf32> to vector<16x1xf32>
    %48 = tpu.reciprocal %47 {approx = true} : vector<16x1xf32> -> vector<16x1xf32>
    %49 = vector.broadcast %48 : vector<16x1xf32> to vector<16x16xf32>
    %50 = arith.mulf %45, %49 : vector<16x16xf32>
    %cst_23 = arith.constant dense<0.000000e+00> : vector<16x8xf32>
    %51 = tpu.matmul %50, %36, %cst_23 {dimension_numbers = #tpu.dot_dimension_numbers<[1], [0], [0], [1], [0, 0, 1, 1], [], []>} : vector<16x16xf32>, vector<16x8xf32>, vector<16x8xf32> -> vector<16x8xf32>
    %c0_24 = arith.constant 0 : index
    %c96 = arith.constant 96 : index
    %52 = vector.load %arg1[%c0_24, %c96] : memref<32x256xf32, #tpu.memory_space<vmem>>, vector<8x32xf32>
    %cst_25 = arith.constant dense<0.000000e+00> : vector<16x32xf32>
    %53 = tpu.matmul %51, %52, %cst_25 {dimension_numbers = #tpu.dot_dimension_numbers<[1], [0], [0], [1], [0, 0, 1, 1], [], []>} : vector<16x8xf32>, vector<8x32xf32>, vector<16x32xf32> -> vector<16x32xf32>
    %54 = arith.addf %33, %53 : vector<16x32xf32>
    %55 = vector.extract_strided_slice %32 {offsets = [0, 24], sizes = [16, 8], strides = [1, 1]} : vector<16x96xf32> to vector<16x8xf32>
    %56 = vector.extract_strided_slice %32 {offsets = [0, 32], sizes = [16, 8], strides = [1, 1]} : vector<16x96xf32> to vector<16x8xf32>
    %57 = vector.extract_strided_slice %32 {offsets = [0, 40], sizes = [16, 8], strides = [1, 1]} : vector<16x96xf32> to vector<16x8xf32>
    %cst_26 = arith.constant dense<0.000000e+00> : vector<16x16xf32>
    %58 = tpu.matmul %55, %56, %cst_26 {dimension_numbers = #tpu.dot_dimension_numbers<[1], [1], [0], [0], [0, 0, 1, 0], [], []>} : vector<16x8xf32>, vector<16x8xf32>, vector<16x16xf32> -> vector<16x16xf32>
    %cst_27 = arith.constant 0.353553385 : f32
    %59 = vector.broadcast %cst_27 : f32 to vector<16x16xf32>
    %60 = arith.mulf %58, %59 : vector<16x16xf32>
    %61 = arith.addf %60, %1 : vector<16x16xf32>
    %cst_28 = arith.constant dense<0xFF800000> : vector<16xf32>
    %62 = vector.multi_reduction <maximumf>, %61, %cst_28 [1] : vector<16x16xf32> to vector<16xf32>
    %63 = vector.shape_cast %62 : vector<16xf32> to vector<16x1xf32>
    %64 = vector.broadcast %63 : vector<16x1xf32> to vector<16x16xf32>
    %65 = arith.subf %61, %64 : vector<16x16xf32>
    %66 = math.exp %65 : vector<16x16xf32>
    %cst_29 = arith.constant dense<0.000000e+00> : vector<16xf32>
    %67 = vector.multi_reduction <add>, %66, %cst_29 [1] : vector<16x16xf32> to vector<16xf32>
    %68 = vector.shape_cast %67 : vector<16xf32> to vector<16x1xf32>
    %69 = tpu.reciprocal %68 {approx = true} : vector<16x1xf32> -> vector<16x1xf32>
    %70 = vector.broadcast %69 : vector<16x1xf32> to vector<16x16xf32>
    %71 = arith.mulf %66, %70 : vector<16x16xf32>
    %cst_30 = arith.constant dense<0.000000e+00> : vector<16x8xf32>
    %72 = tpu.matmul %71, %57, %cst_30 {dimension_numbers = #tpu.dot_dimension_numbers<[1], [0], [0], [1], [0, 0, 1, 1], [], []>} : vector<16x16xf32>, vector<16x8xf32>, vector<16x8xf32> -> vector<16x8xf32>
    %c8 = arith.constant 8 : index
    %c96_31 = arith.constant 96 : index
    %73 = vector.load %arg1[%c8, %c96_31] : memref<32x256xf32, #tpu.memory_space<vmem>>, vector<8x32xf32>
    %cst_32 = arith.constant dense<0.000000e+00> : vector<16x32xf32>
    %74 = tpu.matmul %72, %73, %cst_32 {dimension_numbers = #tpu.dot_dimension_numbers<[1], [0], [0], [1], [0, 0, 1, 1], [], []>} : vector<16x8xf32>, vector<8x32xf32>, vector<16x32xf32> -> vector<16x32xf32>
    %75 = arith.addf %54, %74 : vector<16x32xf32>
    %76 = vector.extract_strided_slice %32 {offsets = [0, 48], sizes = [16, 8], strides = [1, 1]} : vector<16x96xf32> to vector<16x8xf32>
    %77 = vector.extract_strided_slice %32 {offsets = [0, 56], sizes = [16, 8], strides = [1, 1]} : vector<16x96xf32> to vector<16x8xf32>
    %78 = vector.extract_strided_slice %32 {offsets = [0, 64], sizes = [16, 8], strides = [1, 1]} : vector<16x96xf32> to vector<16x8xf32>
    %cst_33 = arith.constant dense<0.000000e+00> : vector<16x16xf32>
    %79 = tpu.matmul %76, %77, %cst_33 {dimension_numbers = #tpu.dot_dimension_numbers<[1], [1], [0], [0], [0, 0, 1, 0], [], []>} : vector<16x8xf32>, vector<16x8xf32>, vector<16x16xf32> -> vector<16x16xf32>
    %cst_34 = arith.constant 0.353553385 : f32
    %80 = vector.broadcast %cst_34 : f32 to vector<16x16xf32>
    %81 = arith.mulf %79, %80 : vector<16x16xf32>
    %82 = arith.addf %81, %1 : vector<16x16xf32>
    %cst_35 = arith.constant dense<0xFF800000> : vector<16xf32>
    %83 = vector.multi_reduction <maximumf>, %82, %cst_35 [1] : vector<16x16xf32> to vector<16xf32>
    %84 = vector.shape_cast %83 : vector<16xf32> to vector<16x1xf32>
    %85 = vector.broadcast %84 : vector<16x1xf32> to vector<16x16xf32>
    %86 = arith.subf %82, %85 : vector<16x16xf32>
    %87 = math.exp %86 : vector<16x16xf32>
    %cst_36 = arith.constant dense<0.000000e+00> : vector<16xf32>
    %88 = vector.multi_reduction <add>, %87, %cst_36 [1] : vector<16x16xf32> to vector<16xf32>
    %89 = vector.shape_cast %88 : vector<16xf32> to vector<16x1xf32>
    %90 = tpu.reciprocal %89 {approx = true} : vector<16x1xf32> -> vector<16x1xf32>
    %91 = vector.broadcast %90 : vector<16x1xf32> to vector<16x16xf32>
    %92 = arith.mulf %87, %91 : vector<16x16xf32>
    %cst_37 = arith.constant dense<0.000000e+00> : vector<16x8xf32>
    %93 = tpu.matmul %92, %78, %cst_37 {dimension_numbers = #tpu.dot_dimension_numbers<[1], [0], [0], [1], [0, 0, 1, 1], [], []>} : vector<16x16xf32>, vector<16x8xf32>, vector<16x8xf32> -> vector<16x8xf32>
    %c16 = arith.constant 16 : index
    %c96_38 = arith.constant 96 : index
    %94 = vector.load %arg1[%c16, %c96_38] : memref<32x256xf32, #tpu.memory_space<vmem>>, vector<8x32xf32>
    %cst_39 = arith.constant dense<0.000000e+00> : vector<16x32xf32>
    %95 = tpu.matmul %93, %94, %cst_39 {dimension_numbers = #tpu.dot_dimension_numbers<[1], [0], [0], [1], [0, 0, 1, 1], [], []>} : vector<16x8xf32>, vector<8x32xf32>, vector<16x32xf32> -> vector<16x32xf32>
    %96 = arith.addf %75, %95 : vector<16x32xf32>
    %97 = vector.extract_strided_slice %32 {offsets = [0, 72], sizes = [16, 8], strides = [1, 1]} : vector<16x96xf32> to vector<16x8xf32>
    %98 = vector.extract_strided_slice %32 {offsets = [0, 80], sizes = [16, 8], strides = [1, 1]} : vector<16x96xf32> to vector<16x8xf32>
    %99 = vector.extract_strided_slice %32 {offsets = [0, 88], sizes = [16, 8], strides = [1, 1]} : vector<16x96xf32> to vector<16x8xf32>
    %cst_40 = arith.constant dense<0.000000e+00> : vector<16x16xf32>
    %100 = tpu.matmul %97, %98, %cst_40 {dimension_numbers = #tpu.dot_dimension_numbers<[1], [1], [0], [0], [0, 0, 1, 0], [], []>} : vector<16x8xf32>, vector<16x8xf32>, vector<16x16xf32> -> vector<16x16xf32>
    %cst_41 = arith.constant 0.353553385 : f32
    %101 = vector.broadcast %cst_41 : f32 to vector<16x16xf32>
    %102 = arith.mulf %100, %101 : vector<16x16xf32>
    %103 = arith.addf %102, %1 : vector<16x16xf32>
    %cst_42 = arith.constant dense<0xFF800000> : vector<16xf32>
    %104 = vector.multi_reduction <maximumf>, %103, %cst_42 [1] : vector<16x16xf32> to vector<16xf32>
    %105 = vector.shape_cast %104 : vector<16xf32> to vector<16x1xf32>
    %106 = vector.broadcast %105 : vector<16x1xf32> to vector<16x16xf32>
    %107 = arith.subf %103, %106 : vector<16x16xf32>
    %108 = math.exp %107 : vector<16x16xf32>
    %cst_43 = arith.constant dense<0.000000e+00> : vector<16xf32>
    %109 = vector.multi_reduction <add>, %108, %cst_43 [1] : vector<16x16xf32> to vector<16xf32>
    %110 = vector.shape_cast %109 : vector<16xf32> to vector<16x1xf32>
    %111 = tpu.reciprocal %110 {approx = true} : vector<16x1xf32> -> vector<16x1xf32>
    %112 = vector.broadcast %111 : vector<16x1xf32> to vector<16x16xf32>
    %113 = arith.mulf %108, %112 : vector<16x16xf32>
    %cst_44 = arith.constant dense<0.000000e+00> : vector<16x8xf32>
    %114 = tpu.matmul %113, %99, %cst_44 {dimension_numbers = #tpu.dot_dimension_numbers<[1], [0], [0], [1], [0, 0, 1, 1], [], []>} : vector<16x16xf32>, vector<16x8xf32>, vector<16x8xf32> -> vector<16x8xf32>
    %c24 = arith.constant 24 : index
    %c96_45 = arith.constant 96 : index
    %115 = vector.load %arg1[%c24, %c96_45] : memref<32x256xf32, #tpu.memory_space<vmem>>, vector<8x32xf32>
    %cst_46 = arith.constant dense<0.000000e+00> : vector<16x32xf32>
    %116 = tpu.matmul %114, %115, %cst_46 {dimension_numbers = #tpu.dot_dimension_numbers<[1], [0], [0], [1], [0, 0, 1, 1], [], []>} : vector<16x8xf32>, vector<8x32xf32>, vector<16x32xf32> -> vector<16x32xf32>
    %117 = arith.addf %96, %116 : vector<16x32xf32>
    %118 = arith.addf %0, %117 : vector<16x32xf32>
    %119 = vector.broadcast %6 : vector<1x32xf32> to vector<16x32xf32>
    %120 = arith.addf %118, %119 : vector<16x32xf32>
    %cst_47 = arith.constant dense<0.000000e+00> : vector<16xf32>
    %121 = vector.multi_reduction <add>, %120, %cst_47 [1] : vector<16x32xf32> to vector<16xf32>
    %122 = vector.shape_cast %121 : vector<16xf32> to vector<16x1xf32>
    %cst_48 = arith.constant 3.200000e+01 : f32
    %123 = vector.broadcast %cst_48 : f32 to vector<16x1xf32>
    %124 = arith.divf %122, %123 : vector<16x1xf32>
    %125 = vector.broadcast %124 : vector<16x1xf32> to vector<16x32xf32>
    %126 = arith.subf %120, %125 : vector<16x32xf32>
    %127 = arith.mulf %126, %126 : vector<16x32xf32>
    %cst_49 = arith.constant dense<0.000000e+00> : vector<16xf32>
    %128 = vector.multi_reduction <add>, %127, %cst_49 [1] : vector<16x32xf32> to vector<16xf32>
    %129 = vector.shape_cast %128 : vector<16xf32> to vector<16x1xf32>
    %cst_50 = arith.constant 3.200000e+01 : f32
    %130 = vector.broadcast %cst_50 : f32 to vector<16x1xf32>
    %131 = arith.divf %129, %130 : vector<16x1xf32>
    %132 = vector.broadcast %124 : vector<16x1xf32> to vector<16x32xf32>
    %133 = arith.subf %120, %132 : vector<16x32xf32>
    %cst_51 = arith.constant 9.99999974E-6 : f32
    %134 = vector.broadcast %cst_51 : f32 to vector<16x1xf32>
    %135 = arith.addf %131, %134 : vector<16x1xf32>
    %136 = math.rsqrt %135 : vector<16x1xf32>
    %137 = vector.broadcast %136 : vector<16x1xf32> to vector<16x32xf32>
    %138 = arith.mulf %133, %137 : vector<16x32xf32>
    %139 = vector.broadcast %4 : vector<1x32xf32> to vector<16x32xf32>
    %140 = arith.mulf %138, %139 : vector<16x32xf32>
    %141 = vector.broadcast %5 : vector<1x32xf32> to vector<16x32xf32>
    %142 = arith.addf %140, %141 : vector<16x32xf32>
    %c0_52 = arith.constant 0 : index
    %c128 = arith.constant 128 : index
    %143 = vector.load %arg1[%c0_52, %c128] : memref<32x256xf32, #tpu.memory_space<vmem>>, vector<32x128xf32>
    %cst_53 = arith.constant dense<0.000000e+00> : vector<16x128xf32>
    %144 = tpu.matmul %142, %143, %cst_53 {dimension_numbers = #tpu.dot_dimension_numbers<[1], [0], [0], [1], [0, 0, 1, 1], [], []>} : vector<16x32xf32>, vector<32x128xf32>, vector<16x128xf32> -> vector<16x128xf32>
    %145 = vector.broadcast %8 : vector<1x128xf32> to vector<16x128xf32>
    %146 = arith.addf %144, %145 : vector<16x128xf32>
    %cst_54 = arith.constant 5.000000e-01 : f32
    %147 = vector.broadcast %cst_54 : f32 to vector<16x128xf32>
    %148 = arith.mulf %147, %146 : vector<16x128xf32>
    %cst_55 = arith.constant 0.707106769 : f32
    %149 = vector.broadcast %cst_55 : f32 to vector<16x128xf32>
    %150 = arith.mulf %146, %149 : vector<16x128xf32>
    %151 = math.erf %150 : vector<16x128xf32>
    %cst_56 = arith.constant 1.000000e+00 : f32
    %152 = vector.broadcast %cst_56 : f32 to vector<16x128xf32>
    %153 = arith.addf %152, %151 : vector<16x128xf32>
    %154 = arith.mulf %148, %153 : vector<16x128xf32>
    %c0_57 = arith.constant 0 : index
    %c0_58 = arith.constant 0 : index
    %155 = vector.load %arg2[%c0_57, %c0_58] : memref<128x32xf32, #tpu.memory_space<vmem>>, vector<128x32xf32>
    %cst_59 = arith.constant dense<0.000000e+00> : vector<16x32xf32>
    %156 = tpu.matmul %154, %155, %cst_59 {dimension_numbers = #tpu.dot_dimension_numbers<[1], [0], [0], [1], [0, 0, 1, 1], [], []>} : vector<16x128xf32>, vector<128x32xf32>, vector<16x32xf32> -> vector<16x32xf32>
    %157 = vector.broadcast %7 : vector<1x32xf32> to vector<16x32xf32>
    %158 = arith.addf %156, %157 : vector<16x32xf32>
    %159 = arith.addf %120, %158 : vector<16x32xf32>
    %c0_60 = arith.constant 0 : index
    %c0_61 = arith.constant 0 : index
    %160 = vector.load %arg5[%c0_60, %c0_61] : memref<16x32xf32, #tpu.memory_space<vmem>>, vector<16x32xf32>
    tpu.vector_store %arg5[%c0_60, %c0_61], %159 {strides = array<i32>} : memref<16x32xf32, #tpu.memory_space<vmem>>, vector<16x32xf32>,
    return
  }
}

</mosaic_0001>

<llo_original>
// kernel: tpu_custom_call.1
$region0: #{tpu_custom_call.1}
  #allocation0 [shape = 'u32[]', space=smem, size = 0x4, offset = 0x4, fixed_abs, tag = 'smem constant byte address 0x4 - core index']
  #allocation1 [shape = 'u32[144,128]{1,0:T(1,128)}', space=vmem, size = 0x12000, scoped, tag = 'internal scratch']
  %s0 = inlined_call_operand.vmem [shape: f32[16,32], index: 0, kind: input, shape index: {}]
  %s1 = inlined_call_operand.vmem [shape: f32[32,256], index: 1, kind: input, shape index: {}]
  %s2 = inlined_call_operand.vmem [shape: f32[128,32], index: 2, kind: input, shape index: {}]
  %s3 = inlined_call_operand.vmem [shape: f32[8,128], index: 3, kind: input, shape index: {}]
  %s4 = inlined_call_operand.vmem [shape: f32[16,16], index: 4, kind: input, shape index: {}]
  %s5 = inlined_call_operand.hbm [shape: f32[16,32], index: 5, kind: output, shape index: {}]
  %s6 = sld [smem:[#allocation0]]
  $region30: #{tpu_custom_call.1} parent=0
    _
  %s8 = ssub.s32 1, %s6
  %s9 = scalar_select 0, %s8, %s6
  $region1: #{tpu_custom_call.1} parent=0
    #allocation2 [shape = 'u8[8192]{0}', space=vmem, size = 0x2000, scoped, tag = 'output window, operand 0, single buffered']
    #allocation3 [shape = 's32[1]{0}', space=sflag, size = 0x4, scoped, tag = 'scoped memory for tpu_custom_call.1']
    %10 = vsyncpa [#allocation3], 0
    // Predicated region
    $region2: #{tpu_custom_call.1} parent=1 // pred_check
      _
    $region3: #{tpu_custom_call.1} parent=1 // pred_check_branch
      %12 = sbr.rel (0) target = $region5
    $region4: #{tpu_custom_call.1} parent=1 // pred_region
      _
    $region5: #{tpu_custom_call.1} parent=1 // pred_fallthru
      _
    // Predicated region
    $region6: #{tpu_custom_call.1} parent=1 // pred_check
      _
    $region7: #{tpu_custom_call.1} parent=1 // pred_check_branch
      %14 = sbr.rel (0) target = $region9
    $region8: #{tpu_custom_call.1} parent=1 // pred_region
      _
    $region9: #{tpu_custom_call.1} parent=1 // pred_fallthru
      _
    // Predicated region
    $region10: #{tpu_custom_call.1} parent=1 // pred_check
      _
    $region11: #{tpu_custom_call.1} parent=1 // pred_check_branch
      %16 = sbr.rel (0) target = $region13
    $region12: #{tpu_custom_call.1} parent=1 // pred_region
      _
    $region13: #{tpu_custom_call.1} parent=1 // pred_fallthru
      _
    // Predicated region
    $region14: #{tpu_custom_call.1} parent=1 // pred_check
      _
    $region15: #{tpu_custom_call.1} parent=1 // pred_check_branch
      %18 = sbr.rel (0) target = $region17
    $region16: #{tpu_custom_call.1} parent=1 // pred_region
      _
    $region17: #{tpu_custom_call.1} parent=1 // pred_fallthru
      _
    // Predicated region
    $region18: #{tpu_custom_call.1} parent=1 // pred_check
      _
    $region19: #{tpu_custom_call.1} parent=1 // pred_check_branch
      %20 = sbr.rel (0) target = $region21
    $region20: #{tpu_custom_call.1} parent=1 // pred_region
      _
    $region21: #{tpu_custom_call.1} parent=1 // pred_fallthru
      _
    %v21 = vld [vmem:[%s0] sm:$0xff]
    %v22 = vld [vmem:[%s0 + $0x8] sm:$0xff]
    %v23 = vld [vmem:[%s4] sm:$0xff]
    %v24 = vld [vmem:[%s4 + $0x8] sm:$0xff]
    %v25 = vld [vmem:[%s3] sm:$0x1]
    %v26 = vld [vmem:[%s3 + $0x1] sm:$0x1]
    %v27 = vld [vmem:[%s3 + $0x2] sm:$0x1]
    %v28 = vld [vmem:[%s3 + $0x3] sm:$0x1]
    %v29 = vld [vmem:[%s3 + $0x4] sm:$0x1]
    %v30 = vld [vmem:[%s3 + $0x5] sm:$0x1]
    %v31 = vld [vmem:[%s3 + $0x6] sm:$0x1]
    %vm32 = vcmask 261120
    %v33 = vsel %vm32, %v21, 0.0
    %34 = vadd.xlane.f32.xlu0 %v33
    %v35 = vpop.xlane.xlu0 %34
    %v36 = vsel %vm32, %v22, 0.0
    %37 = vadd.xlane.f32.xlu0 %v36
    %v38 = vpop.xlane.xlu0 %37
    %v39 = vrcp.pop 32.0
    %v40 = vmul.f32 %v35, %v39
    %v41 = vmul.f32 %v38, %v39
    %v42 = vsub.f32 %v21, %v40
    %v43 = vsub.f32 %v22, %v41
    %v44 = vmul.f32 %v42, %v42
    %v45 = vmul.f32 %v43, %v43
    %v46 = vsel %vm32, %v44, 0.0
    %47 = vadd.xlane.f32.xlu0 %v46
    %v48 = vpop.xlane.xlu0 %47
    %v49 = vsel %vm32, %v45, 0.0
    %50 = vadd.xlane.f32.xlu0 %v49
    %v51 = vpop.xlane.xlu0 %50
    %v52 = vmul.f32 %v48, %v39
    %v53 = vmul.f32 %v51, %v39
    %v54 = vadd.f32 %v52, 1e-05
    %v55 = vadd.f32 %v53, 1e-05
    %v56 = vrsqrt.pop %v54
    %v57 = vrsqrt.pop %v55
    %v58 = vmul.f32 %v42, %v56
    %v59 = vmul.f32 %v43, %v57
    %v60 = vlaneseq
    %v61 = vshrl.u32 %v60, 7
    %v62 = vsub.s32 0, %v61
    %v63 = vrot.slane %v25, %v62
    %v64 = vmul.f32 %v58, %v63
    %v65 = vmul.f32 %v59, %v63
    %v66 = vlaneseq
    %v67 = vshrl.u32 %v66, 7
    %v68 = vsub.s32 0, %v67
    %v69 = vrot.slane %v26, %v68
    %v70 = vadd.f32 %v64, %v69
    %v71 = vadd.f32 %v65, %v69
    %v72 = vld [vmem:[%s1] sm:$0xff]
    %v73 = vld [vmem:[%s1 + $0x10] sm:$0xff]
    %v74 = vld [vmem:[%s1 + $0x20] sm:$0xff]
    %v75 = vld [vmem:[%s1 + $0x30] sm:$0xff]
    %v77 = vsel %vm32, %v70, 0
    %v80 = vsel %vm32, %v71, 0
    %82 = vmatprep.subr.mxu0 0.0
    %83 = vmatpush1.msra.mxu0 %v72
    %84 = vmatprep.subr.mxu0 0.0
    %85 = vmatpush1.msra.mxu0 %v73
    %86 = vmatprep.subr.mxu0 0.0
    %87 = vmatpush1.msra.mxu0 %v74
    %88 = vmatprep.subr.mxu0 0.0
    %89 = vmatpush1.msra.mxu0 %v75
    %90 = vmatprep.subr.mxu0 0.0
    %91 = vmatpush1.msra.mxu0 0.0
    %92 = vmatprep.subr.mxu0 0.0
    %93 = vmatpush1.msra.mxu0 0.0
    %94 = vmatprep.subr.mxu0 0.0
    %95 = vmatpush1.msra.mxu0 0.0
    %96 = vmatprep.subr.mxu0 0.0
    %97 = vmatpush1.msra.mxu0 0.0
    %98 = vmatprep.subr.mxu0 0.0
    %99 = vmatpush1.msra.mxu0 0.0
    %100 = vmatprep.subr.mxu0 0.0
    %101 = vmatpush1.msra.mxu0 0.0
    %102 = vmatprep.subr.mxu0 0.0
    %103 = vmatpush1.msra.mxu0 0.0
    %104 = vmatprep.subr.mxu0 0.0
    %105 = vmatpush1.msra.mxu0 0.0
    %106 = vmatprep.subr.mxu0 0.0
    %107 = vmatpush1.msra.mxu0 0.0
    %108 = vmatprep.subr.mxu0 0.0
    %109 = vmatpush1.msra.mxu0 0.0
    %110 = vmatprep.subr.mxu0 0.0
    %111 = vmatpush1.msra.mxu0 0.0
    %112 = vmatprep.subr.mxu0 0.0
    %113 = vmatpush1.msra.mxu0 0.0
    %114 = vmatprep.subr.mxu0 0.0
    %115 = vmatpush1.msra.mxu0 0.0
    %116 = vmatprep.subr.mxu0 0.0
    %117 = vmatpush1.msra.mxu0 0.0
    %118 = vmatprep.subr.mxu0 0.0
    %119 = vmatpush1.msra.mxu0 0.0
    %120 = vmatprep.subr.mxu0 0.0
    %121 = vmatpush1.msra.mxu0 0.0
    %122 = vmatprep.subr.mxu0 0.0
    %123 = vmatpush1.msra.mxu0 0.0
    %124 = vmatprep.subr.mxu0 0.0
    %125 = vmatpush1.msra.mxu0 0.0
    %126 = vmatprep.subr.mxu0 0.0
    %127 = vmatpush1.msra.mxu0 0.0
    %128 = vmatprep.subr.mxu0 0.0
    %129 = vmatpush1.msra.mxu0 0.0
    %130 = vmatprep.subr.mxu0 0.0
    %131 = vmatpush1.msra.mxu0 0.0
    %132 = vmatprep.subr.mxu0 0.0
    %133 = vmatpush1.msra.mxu0 0.0
    %134 = vmatprep.subr.mxu0 0.0
    %135 = vmatpush1.msra.mxu0 0.0
    %136 = vmatprep.subr.mxu0 0.0
    %137 = vmatpush1.msra.mxu0 0.0
    %138 = vmatprep.subr.mxu0 0.0
    %139 = vmatpush1.msra.mxu0 0.0
    %140 = vmatprep.subr.mxu0 0.0
    %141 = vmatpush1.msra.mxu0 0.0
    %142 = vmatprep.subr.mxu0 0.0
    %143 = vmatpush1.msra.mxu0 0.0
    %144 = vmatprep.subr.mxu0 0.0
    %145 = vmatpush1.msra.mxu0 0.0
    %146 = vmatprep.mubr.f32.mxu0 0.0
    %147 = vmatmul.mubr.f32.gmra.mrb[0].mxu0 %v77
    %v148 = vpop.f32.mrb[0].mxu0
    %v149 = vadd.f32 0.0, %v148
    %v150 = vpop.f32.mrb[0].mxu0
    %151 = vmatprep.mubr.f32.mxu0 0.0
    %152 = vmatmul.mubr.f32.gmra.mrb[0].mxu0 %v80
    %v153 = vpop.f32.mrb[0].mxu0
    %v154 = vadd.f32 0.0, %v153
    %v155 = vpop.f32.mrb[0].mxu0
    %156 = vdwg.mxu0
    %159 = vrot.lane.b32.xlu0 %v149, 120
    %v160 = vpop.permute.xlu0 %159
    %161 = vrot.lane.b32.xlu0 %v154, 120
    %v162 = vpop.permute.xlu0 %161
    %vm163 = vcmask 64512
    %v164 = vsel %vm163, %v149, 0
    %v166 = vsel %vm163, %v154, 0
    %v168 = vsel %vm163, %v160, 0
    %v170 = vsel %vm163, %v162, 0
    %172 = vmatprep.subr.mxu0 0.0
    %173 = vmatpush1.xpose.msra.mxu0 %v168
    %174 = vmatprep.subr.mxu0 0.0
    %175 = vmatpush1.xpose.msra.mxu0 %v170
    %176 = vmatprep.subr.mxu0 0.0
    %177 = vmatpush1.xpose.msra.mxu0 0.0
    %178 = vmatprep.subr.mxu0 0.0
    %179 = vmatpush1.xpose.msra.mxu0 0.0
    %180 = vmatprep.subr.mxu0 0.0
    %181 = vmatpush1.xpose.msra.mxu0 0.0
    %182 = vmatprep.subr.mxu0 0.0
    %183 = vmatpush1.xpose.msra.mxu0 0.0
    %184 = vmatprep.subr.mxu0 0.0
    %185 = vmatpush1.xpose.msra.mxu0 0.0
    %186 = vmatprep.subr.mxu0 0.0
    %187 = vmatpush1.xpose.msra.mxu0 0.0
    %188 = vmatprep.subr.mxu0 0.0
    %189 = vmatpush1.xpose.msra.mxu0 0.0
    %190 = vmatprep.subr.mxu0 0.0
    %191 = vmatpush1.xpose.msra.mxu0 0.0
    %192 = vmatprep.subr.mxu0 0.0
    %193 = vmatpush1.xpose.msra.mxu0 0.0
    %194 = vmatprep.subr.mxu0 0.0
    %195 = vmatpush1.xpose.msra.mxu0 0.0
    %196 = vmatprep.subr.mxu0 0.0
    %197 = vmatpush1.xpose.msra.mxu0 0.0
    %198 = vmatprep.subr.mxu0 0.0
    %199 = vmatpush1.xpose.msra.mxu0 0.0
    %200 = vmatprep.subr.mxu0 0.0
    %201 = vmatpush1.xpose.msra.mxu0 0.0
    %202 = vmatprep.subr.mxu0 0.0
    %203 = vmatpush1.xpose.msra.mxu0 0.0
    %204 = vmatprep.subr.mxu0 0.0
    %205 = vmatpush1.xpose.msra.mxu0 0.0
    %206 = vmatprep.subr.mxu0 0.0
    %207 = vmatpush1.xpose.msra.mxu0 0.0
    %208 = vmatprep.subr.mxu0 0.0
    %209 = vmatpush1.xpose.msra.mxu0 0.0
    %210 = vmatprep.subr.mxu0 0.0
    %211 = vmatpush1.xpose.msra.mxu0 0.0
    %212 = vmatprep.subr.mxu0 0.0
    %213 = vmatpush1.xpose.msra.mxu0 0.0
    %214 = vmatprep.subr.mxu0 0.0
    %215 = vmatpush1.xpose.msra.mxu0 0.0
    %216 = vmatprep.subr.mxu0 0.0
    %217 = vmatpush1.xpose.msra.mxu0 0.0
    %218 = vmatprep.subr.mxu0 0.0
    %219 = vmatpush1.xpose.msra.mxu0 0.0
    %220 = vmatprep.subr.mxu0 0.0
    %221 = vmatpush1.xpose.msra.mxu0 0.0
    %222 = vmatprep.subr.mxu0 0.0
    %223 = vmatpush1.xpose.msra.mxu0 0.0
    %224 = vmatprep.subr.mxu0 0.0
    %225 = vmatpush1.xpose.msra.mxu0 0.0
    %226 = vmatprep.subr.mxu0 0.0
    %227 = vmatpush1.xpose.msra.mxu0 0.0
    %228 = vmatprep.subr.mxu0 0.0
    %229 = vmatpush1.xpose.msra.mxu0 0.0
    %230 = vmatprep.subr.mxu0 0.0
    %231 = vmatpush1.xpose.msra.mxu0 0.0
    %232 = vmatprep.subr.mxu0 0.0
    %233 = vmatpush1.xpose.msra.mxu0 0.0
    %234 = vmatprep.subr.mxu0 0.0
    %235 = vmatpush1.xpose.msra.mxu0 0.0
    %236 = vmatprep.mubr.f32.mxu0 0.0
    %237 = vmatmul.mubr.f32.gmra.mrb[0].mxu0 %v164
    %v238 = vpop.f32.mrb[0].mxu0
    %v239 = vadd.f32 0.0, %v238
    %v240 = vpop.f32.mrb[0].mxu0
    %241 = vmatprep.mubr.f32.mxu0 0.0
    %242 = vmatmul.mubr.f32.gmra.mrb[0].mxu0 %v166
    %v243 = vpop.f32.mrb[0].mxu0
    %v244 = vadd.f32 0.0, %v243
    %v245 = vpop.f32.mrb[0].mxu0
    %246 = vdwg.mxu0
    %v247 = vmul.f32 %v239, 0.35355338
    %v248 = vmul.f32 %v244, 0.35355338
    %v249 = vadd.f32 %v247, %v23
    %v250 = vadd.f32 %v248, %v24
    %vm251 = vcmask 130048
    %v252 = vsel %vm251, %v249, -inf
    %253 = vmax.xlane.f32.xlu0 %v252
    %v254 = vpop.xlane.xlu0 %253
    %v255 = vsel %vm251, %v250, -inf
    %256 = vmax.xlane.f32.xlu0 %v255
    %v257 = vpop.xlane.xlu0 %256
    %v258 = vsub.f32 %v249, %v254
    %v259 = vsub.f32 %v250, %v257
    %v260 = vmul.f32 %v258, 1.442695
    %v261 = vpow.pop %v260
    %v262 = vmul.f32 %v259, 1.442695
    %v263 = vpow.pop %v262
    %v264 = vsel %vm251, %v261, 0.0
    %265 = vadd.xlane.f32.xlu0 %v264
    %v266 = vpop.xlane.xlu0 %265
    %v267 = vsel %vm251, %v263, 0.0
    %268 = vadd.xlane.f32.xlu0 %v267
    %v269 = vpop.xlane.xlu0 %268
    %v270 = vrcp.pop %v266
    %v271 = vrcp.pop %v269
    %v272 = vmul.f32 %v261, %v270
    %v273 = vmul.f32 %v263, %v271
    %274 = vrot.lane.b32.xlu0 %v149, 112
    %v275 = vpop.permute.xlu0 %274
    %276 = vrot.lane.b32.xlu0 %v154, 112
    %v277 = vpop.permute.xlu0 %276
    %v281 = vsel %vm251, %v272, 0
    %v284 = vsel %vm251, %v273, 0
    %286 = vmatprep.subr.mxu0 0.0
    %287 = vmatpush1.msra.mxu0 %v275
    %288 = vmatprep.subr.mxu0 0.0
    %289 = vmatpush1.msra.mxu0 %v277
    %290 = vmatprep.subr.mxu0 0.0
    %291 = vmatpush1.msra.mxu0 0.0
    %292 = vmatprep.subr.mxu0 0.0
    %293 = vmatpush1.msra.mxu0 0.0
    %294 = vmatprep.subr.mxu0 0.0
    %295 = vmatpush1.msra.mxu0 0.0
    %296 = vmatprep.subr.mxu0 0.0
    %297 = vmatpush1.msra.mxu0 0.0
    %298 = vmatprep.subr.mxu0 0.0
    %299 = vmatpush1.msra.mxu0 0.0
    %300 = vmatprep.subr.mxu0 0.0
    %301 = vmatpush1.msra.mxu0 0.0
    %302 = vmatprep.subr.mxu0 0.0
    %303 = vmatpush1.msra.mxu0 0.0
    %304 = vmatprep.subr.mxu0 0.0
    %305 = vmatpush1.msra.mxu0 0.0
    %306 = vmatprep.subr.mxu0 0.0
    %307 = vmatpush1.msra.mxu0 0.0
    %308 = vmatprep.subr.mxu0 0.0
    %309 = vmatpush1.msra.mxu0 0.0
    %310 = vmatprep.subr.mxu0 0.0
    %311 = vmatpush1.msra.mxu0 0.0
    %312 = vmatprep.subr.mxu0 0.0
    %313 = vmatpush1.msra.mxu0 0.0
    %314 = vmatprep.subr.mxu0 0.0
    %315 = vmatpush1.msra.mxu0 0.0
    %316 = vmatprep.subr.mxu0 0.0
    %317 = vmatpush1.msra.mxu0 0.0
    %318 = vmatprep.subr.mxu0 0.0
    %319 = vmatpush1.msra.mxu0 0.0
    %320 = vmatprep.subr.mxu0 0.0
    %321 = vmatpush1.msra.mxu0 0.0
    %322 = vmatprep.subr.mxu0 0.0
    %323 = vmatpush1.msra.mxu0 0.0
    %324 = vmatprep.subr.mxu0 0.0
    %325 = vmatpush1.msra.mxu0 0.0
    %326 = vmatprep.subr.mxu0 0.0
    %327 = vmatpush1.msra.mxu0 0.0
    %328 = vmatprep.subr.mxu0 0.0
    %329 = vmatpush1.msra.mxu0 0.0
    %330 = vmatprep.subr.mxu0 0.0
    %331 = vmatpush1.msra.mxu0 0.0
    %332 = vmatprep.subr.mxu0 0.0
    %333 = vmatpush1.msra.mxu0 0.0
    %334 = vmatprep.subr.mxu0 0.0
    %335 = vmatpush1.msra.mxu0 0.0
    %336 = vmatprep.subr.mxu0 0.0
    %337 = vmatpush1.msra.mxu0 0.0
    %338 = vmatprep.subr.mxu0 0.0
    %339 = vmatpush1.msra.mxu0 0.0
    %340 = vmatprep.subr.mxu0 0.0
    %341 = vmatpush1.msra.mxu0 0.0
    %342 = vmatprep.subr.mxu0 0.0
    %343 = vmatpush1.msra.mxu0 0.0
    %344 = vmatprep.subr.mxu0 0.0
    %345 = vmatpush1.msra.mxu0 0.0
    %346 = vmatprep.subr.mxu0 0.0
    %347 = vmatpush1.msra.mxu0 0.0
    %348 = vmatprep.subr.mxu0 0.0
    %349 = vmatpush1.msra.mxu0 0.0
    %350 = vmatprep.mubr.f32.mxu0 0.0
    %351 = vmatmul.mubr.f32.gmra.mrb[0].mxu0 %v281
    %v352 = vpop.f32.mrb[0].mxu0
    %v353 = vadd.f32 0.0, %v352
    %v354 = vpop.f32.mrb[0].mxu0
    %355 = vmatprep.mubr.f32.mxu0 0.0
    %356 = vmatmul.mubr.f32.gmra.mrb[0].mxu0 %v284
    %v357 = vpop.f32.mrb[0].mxu0
    %v358 = vadd.f32 0.0, %v357
    %v359 = vpop.f32.mrb[0].mxu0
    %360 = vdwg.mxu0
    %v361 = vld [vmem:[%s1] sm:$0xff]
    %362 = vrot.lane.b32.xlu0 %v149, 104
    %v363 = vpop.permute.xlu0 %362
    %364 = vrot.lane.b32.xlu0 %v154, 104
    %v365 = vpop.permute.xlu0 %364
    %366 = vrot.lane.b32.xlu0 %v149, 96
    %v367 = vpop.permute.xlu0 %366
    %368 = vrot.lane.b32.xlu0 %v154, 96
    %v369 = vpop.permute.xlu0 %368
    %v370 = vsel %vm163, %v363, 0
    %v372 = vsel %vm163, %v365, 0
    %v374 = vsel %vm163, %v367, 0
    %v376 = vsel %vm163, %v369, 0
    %378 = vmatprep.subr.mxu0 0.0
    %379 = vmatpush1.xpose.msra.mxu0 %v374
    %380 = vmatprep.subr.mxu0 0.0
    %381 = vmatpush1.xpose.msra.mxu0 %v376
    %382 = vmatprep.subr.mxu0 0.0
    %383 = vmatpush1.xpose.msra.mxu0 0.0
    %384 = vmatprep.subr.mxu0 0.0
    %385 = vmatpush1.xpose.msra.mxu0 0.0
    %386 = vmatprep.subr.mxu0 0.0
    %387 = vmatpush1.xpose.msra.mxu0 0.0
    %388 = vmatprep.subr.mxu0 0.0
    %389 = vmatpush1.xpose.msra.mxu0 0.0
    %390 = vmatprep.subr.mxu0 0.0
    %391 = vmatpush1.xpose.msra.mxu0 0.0
    %392 = vmatprep.subr.mxu0 0.0
    %393 = vmatpush1.xpose.msra.mxu0 0.0
    %394 = vmatprep.subr.mxu0 0.0
    %395 = vmatpush1.xpose.msra.mxu0 0.0
    %396 = vmatprep.subr.mxu0 0.0
    %397 = vmatpush1.xpose.msra.mxu0 0.0
    %398 = vmatprep.subr.mxu0 0.0
    %399 = vmatpush1.xpose.msra.mxu0 0.0
    %400 = vmatprep.subr.mxu0 0.0
    %401 = vmatpush1.xpose.msra.mxu0 0.0
    %402 = vmatprep.subr.mxu0 0.0
    %403 = vmatpush1.xpose.msra.mxu0 0.0
    %404 = vmatprep.subr.mxu0 0.0
    %405 = vmatpush1.xpose.msra.mxu0 0.0
    %406 = vmatprep.subr.mxu0 0.0
    %407 = vmatpush1.xpose.msra.mxu0 0.0
    %408 = vmatprep.subr.mxu0 0.0
    %409 = vmatpush1.xpose.msra.mxu0 0.0
    %410 = vmatprep.subr.mxu0 0.0
    %411 = vmatpush1.xpose.msra.mxu0 0.0
    %412 = vmatprep.subr.mxu0 0.0
    %413 = vmatpush1.xpose.msra.mxu0 0.0
    %414 = vmatprep.subr.mxu0 0.0
    %415 = vmatpush1.xpose.msra.mxu0 0.0
    %416 = vmatprep.subr.mxu0 0.0
    %417 = vmatpush1.xpose.msra.mxu0 0.0
    %418 = vmatprep.subr.mxu0 0.0
    %419 = vmatpush1.xpose.msra.mxu0 0.0
    %420 = vmatprep.subr.mxu0 0.0
    %421 = vmatpush1.xpose.msra.mxu0 0.0
    %422 = vmatprep.subr.mxu0 0.0
    %423 = vmatpush1.xpose.msra.mxu0 0.0
    %424 = vmatprep.subr.mxu0 0.0
    %425 = vmatpush1.xpose.msra.mxu0 0.0
    %426 = vmatprep.subr.mxu0 0.0
    %427 = vmatpush1.xpose.msra.mxu0 0.0
    %428 = vmatprep.subr.mxu0 0.0
    %429 = vmatpush1.xpose.msra.mxu0 0.0
    %430 = vmatprep.subr.mxu0 0.0
    %431 = vmatpush1.xpose.msra.mxu0 0.0
    %432 = vmatprep.subr.mxu0 0.0
    %433 = vmatpush1.xpose.msra.mxu0 0.0
    %434 = vmatprep.subr.mxu0 0.0
    %435 = vmatpush1.xpose.msra.mxu0 0.0
    %436 = vmatprep.subr.mxu0 0.0
    %437 = vmatpush1.xpose.msra.mxu0 0.0
    %438 = vmatprep.subr.mxu0 0.0
    %439 = vmatpush1.xpose.msra.mxu0 0.0
    %440 = vmatprep.subr.mxu0 0.0
    %441 = vmatpush1.xpose.msra.mxu0 0.0
    %442 = vmatprep.mubr.f32.mxu0 0.0
    %443 = vmatmul.mubr.f32.gmra.mrb[0].mxu0 %v370
    %v444 = vpop.f32.mrb[0].mxu0
    %v445 = vadd.f32 0.0, %v444
    %v446 = vpop.f32.mrb[0].mxu0
    %447 = vmatprep.mubr.f32.mxu0 0.0
    %448 = vmatmul.mubr.f32.gmra.mrb[0].mxu0 %v372
    %v449 = vpop.f32.mrb[0].mxu0
    %v450 = vadd.f32 0.0, %v449
    %v451 = vpop.f32.mrb[0].mxu0
    %452 = vdwg.mxu0
    %v453 = vmul.f32 %v445, 0.35355338
    %v454 = vmul.f32 %v450, 0.35355338
    %v455 = vadd.f32 %v453, %v23
    %v456 = vadd.f32 %v454, %v24
    %v457 = vsel %vm251, %v455, -inf
    %458 = vmax.xlane.f32.xlu0 %v457
    %v459 = vpop.xlane.xlu0 %458
    %v460 = vsel %vm251, %v456, -inf
    %461 = vmax.xlane.f32.xlu0 %v460
    %v462 = vpop.xlane.xlu0 %461
    %v463 = vsub.f32 %v455, %v459
    %v464 = vsub.f32 %v456, %v462
    %v465 = vmul.f32 %v463, 1.442695
    %v466 = vpow.pop %v465
    %v467 = vmul.f32 %v464, 1.442695
    %v468 = vpow.pop %v467
    %v469 = vsel %vm251, %v466, 0.0
    %470 = vadd.xlane.f32.xlu0 %v469
    %v471 = vpop.xlane.xlu0 %470
    %v472 = vsel %vm251, %v468, 0.0
    %473 = vadd.xlane.f32.xlu0 %v472
    %v474 = vpop.xlane.xlu0 %473
    %v475 = vrcp.pop %v471
    %v476 = vrcp.pop %v474
    %v477 = vmul.f32 %v466, %v475
    %v478 = vmul.f32 %v468, %v476
    %479 = vrot.lane.b32.xlu0 %v149, 88
    %v480 = vpop.permute.xlu0 %479
    %481 = vrot.lane.b32.xlu0 %v154, 88
    %v482 = vpop.permute.xlu0 %481
    %v486 = vsel %vm251, %v477, 0
    %v489 = vsel %vm251, %v478, 0
    %491 = vmatprep.subr.mxu0 0.0
    %492 = vmatpush1.msra.mxu0 %v480
    %493 = vmatprep.subr.mxu0 0.0
    %494 = vmatpush1.msra.mxu0 %v482
    %495 = vmatprep.subr.mxu0 0.0
    %496 = vmatpush1.msra.mxu0 0.0
    %497 = vmatprep.subr.mxu0 0.0
    %498 = vmatpush1.msra.mxu0 0.0
    %499 = vmatprep.subr.mxu0 0.0
    %500 = vmatpush1.msra.mxu0 0.0
    %501 = vmatprep.subr.mxu0 0.0
    %502 = vmatpush1.msra.mxu0 0.0
    %503 = vmatprep.subr.mxu0 0.0
    %504 = vmatpush1.msra.mxu0 0.0
    %505 = vmatprep.subr.mxu0 0.0
    %506 = vmatpush1.msra.mxu0 0.0
    %507 = vmatprep.subr.mxu0 0.0
    %508 = vmatpush1.msra.mxu0 0.0
    %509 = vmatprep.subr.mxu0 0.0
    %510 = vmatpush1.msra.mxu0 0.0
    %511 = vmatprep.subr.mxu0 0.0
    %512 = vmatpush1.msra.mxu0 0.0
    %513 = vmatprep.subr.mxu0 0.0
    %514 = vmatpush1.msra.mxu0 0.0
    %515 = vmatprep.subr.mxu0 0.0
    %516 = vmatpush1.msra.mxu0 0.0
    %517 = vmatprep.subr.mxu0 0.0
    %518 = vmatpush1.msra.mxu0 0.0
    %519 = vmatprep.subr.mxu0 0.0
    %520 = vmatpush1.msra.mxu0 0.0
    %521 = vmatprep.subr.mxu0 0.0
    %522 = vmatpush1.msra.mxu0 0.0
    %523 = vmatprep.subr.mxu0 0.0
    %524 = vmatpush1.msra.mxu0 0.0
    %525 = vmatprep.subr.mxu0 0.0
    %526 = vmatpush1.msra.mxu0 0.0
    %527 = vmatprep.subr.mxu0 0.0
    %528 = vmatpush1.msra.mxu0 0.0
    %529 = vmatprep.subr.mxu0 0.0
    %530 = vmatpush1.msra.mxu0 0.0
    %531 = vmatprep.subr.mxu0 0.0
    %532 = vmatpush1.msra.mxu0 0.0
    %533 = vmatprep.subr.mxu0 0.0
    %534 = vmatpush1.msra.mxu0 0.0
    %535 = vmatprep.subr.mxu0 0.0
    %536 = vmatpush1.msra.mxu0 0.0
    %537 = vmatprep.subr.mxu0 0.0
    %538 = vmatpush1.msra.mxu0 0.0
    %539 = vmatprep.subr.mxu0 0.0
    %540 = vmatpush1.msra.mxu0 0.0
    %541 = vmatprep.subr.mxu0 0.0
    %542 = vmatpush1.msra.mxu0 0.0
    %543 = vmatprep.subr.mxu0 0.0
    %544 = vmatpush1.msra.mxu0 0.0
    %545 = vmatprep.subr.mxu0 0.0
    %546 = vmatpush1.msra.mxu0 0.0
    %547 = vmatprep.subr.mxu0 0.0
    %548 = vmatpush1.msra.mxu0 0.0
    %549 = vmatprep.subr.mxu0 0.0
    %550 = vmatpush1.msra.mxu0 0.0
    %551 = vmatprep.subr.mxu0 0.0
    %552 = vmatpush1.msra.mxu0 0.0
    %553 = vmatprep.subr.mxu0 0.0
    %554 = vmatpush1.msra.mxu0 0.0
    %555 = vmatprep.mubr.f32.mxu0 0.0
    %556 = vmatmul.mubr.f32.gmra.mrb[0].mxu0 %v486
    %v557 = vpop.f32.mrb[0].mxu0
    %v558 = vadd.f32 0.0, %v557
    %v559 = vpop.f32.mrb[0].mxu0
    %560 = vmatprep.mubr.f32.mxu0 0.0
    %561 = vmatmul.mubr.f32.gmra.mrb[0].mxu0 %v489
    %v562 = vpop.f32.mrb[0].mxu0
    %v563 = vadd.f32 0.0, %v562
    %v564 = vpop.f32.mrb[0].mxu0
    %565 = vdwg.mxu0
    %v566 = vld [vmem:[%s1 + $0x10] sm:$0xff]
    %568 = vrot.lane.b32.xlu0 %v566, 32
    %v569 = vpop.permute.xlu0 %568
    %v572 = vsel %vm163, %v558, 0
    %v575 = vsel %vm163, %v563, 0
    %577 = vmatprep.subr.mxu0 0.0
    %578 = vmatpush1.msra.mxu0 %v569
    %579 = vmatprep.subr.mxu0 0.0
    %580 = vmatpush1.msra.mxu0 0.0
    %581 = vmatprep.subr.mxu0 0.0
    %582 = vmatpush1.msra.mxu0 0.0
    %583 = vmatprep.subr.mxu0 0.0
    %584 = vmatpush1.msra.mxu0 0.0
    %585 = vmatprep.subr.mxu0 0.0
    %586 = vmatpush1.msra.mxu0 0.0
    %587 = vmatprep.subr.mxu0 0.0
    %588 = vmatpush1.msra.mxu0 0.0
    %589 = vmatprep.subr.mxu0 0.0
    %590 = vmatpush1.msra.mxu0 0.0
    %591 = vmatprep.subr.mxu0 0.0
    %592 = vmatpush1.msra.mxu0 0.0
    %593 = vmatprep.subr.mxu0 0.0
    %594 = vmatpush1.msra.mxu0 0.0
    %595 = vmatprep.subr.mxu0 0.0
    %596 = vmatpush1.msra.mxu0 0.0
    %597 = vmatprep.subr.mxu0 0.0
    %598 = vmatpush1.msra.mxu0 0.0
    %599 = vmatprep.subr.mxu0 0.0
    %600 = vmatpush1.msra.mxu0 0.0
    %601 = vmatprep.subr.mxu0 0.0
    %602 = vmatpush1.msra.mxu0 0.0
    %603 = vmatprep.subr.mxu0 0.0
    %604 = vmatpush1.msra.mxu0 0.0
    %605 = vmatprep.subr.mxu0 0.0
    %606 = vmatpush1.msra.mxu0 0.0
    %607 = vmatprep.subr.mxu0 0.0
    %608 = vmatpush1.msra.mxu0 0.0
    %609 = vmatprep.subr.mxu0 0.0
    %610 = vmatpush1.msra.mxu0 0.0
    %611 = vmatprep.subr.mxu0 0.0
    %612 = vmatpush1.msra.mxu0 0.0
    %613 = vmatprep.subr.mxu0 0.0
    %614 = vmatpush1.msra.mxu0 0.0
    %615 = vmatprep.subr.mxu0 0.0
    %616 = vmatpush1.msra.mxu0 0.0
    %617 = vmatprep.subr.mxu0 0.0
    %618 = vmatpush1.msra.mxu0 0.0
    %619 = vmatprep.subr.mxu0 0.0
    %620 = vmatpush1.msra.mxu0 0.0
    %621 = vmatprep.subr.mxu0 0.0
    %622 = vmatpush1.msra.mxu0 0.0
    %623 = vmatprep.subr.mxu0 0.0
    %624 = vmatpush1.msra.mxu0 0.0
    %625 = vmatprep.subr.mxu0 0.0
    %626 = vmatpush1.msra.mxu0 0.0
    %627 = vmatprep.subr.mxu0 0.0
    %628 = vmatpush1.msra.mxu0 0.0
    %629 = vmatprep.subr.mxu0 0.0
    %630 = vmatpush1.msra.mxu0 0.0
    %631 = vmatprep.subr.mxu0 0.0
    %632 = vmatpush1.msra.mxu0 0.0
    %633 = vmatprep.subr.mxu0 0.0
    %634 = vmatpush1.msra.mxu0 0.0
    %635 = vmatprep.subr.mxu0 0.0
    %636 = vmatpush1.msra.mxu0 0.0
    %637 = vmatprep.subr.mxu0 0.0
    %638 = vmatpush1.msra.mxu0 0.0
    %639 = vmatprep.subr.mxu0 0.0
    %640 = vmatpush1.msra.mxu0 0.0
    %641 = vmatprep.mubr.f32.mxu0 0.0
    %642 = vmatmul.mubr.f32.gmra.mrb[0].mxu0 %v572
    %v643 = vpop.f32.mrb[0].mxu0
    %v644 = vadd.f32 0.0, %v643
    %v645 = vpop.f32.mrb[0].mxu0
    %646 = vmatprep.mubr.f32.mxu0 0.0
    %647 = vmatmul.mubr.f32.gmra.mrb[0].mxu0 %v575
    %v648 = vpop.f32.mrb[0].mxu0
    %v649 = vadd.f32 0.0, %v648
    %v650 = vpop.f32.mrb[0].mxu0
    %651 = vdwg.mxu0
    %653 = vrot.lane.b32.xlu0 %v361, 32
    %v654 = vpop.permute.xlu0 %653
    %v657 = vsel %vm163, %v353, 0
    %v660 = vsel %vm163, %v358, 0
    %662 = vmatprep.subr.mxu0 0.0
    %663 = vmatpush1.msra.mxu0 %v654
    %664 = vmatprep.subr.mxu0 0.0
    %665 = vmatpush1.msra.mxu0 0.0
    %666 = vmatprep.subr.mxu0 0.0
    %667 = vmatpush1.msra.mxu0 0.0
    %668 = vmatprep.subr.mxu0 0.0
    %669 = vmatpush1.msra.mxu0 0.0
    %670 = vmatprep.subr.mxu0 0.0
    %671 = vmatpush1.msra.mxu0 0.0
    %672 = vmatprep.subr.mxu0 0.0
    %673 = vmatpush1.msra.mxu0 0.0
    %674 = vmatprep.subr.mxu0 0.0
    %675 = vmatpush1.msra.mxu0 0.0
    %676 = vmatprep.subr.mxu0 0.0
    %677 = vmatpush1.msra.mxu0 0.0
    %678 = vmatprep.subr.mxu0 0.0
    %679 = vmatpush1.msra.mxu0 0.0
    %680 = vmatprep.subr.mxu0 0.0
    %681 = vmatpush1.msra.mxu0 0.0
    %682 = vmatprep.subr.mxu0 0.0
    %683 = vmatpush1.msra.mxu0 0.0
    %684 = vmatprep.subr.mxu0 0.0
    %685 = vmatpush1.msra.mxu0 0.0
    %686 = vmatprep.subr.mxu0 0.0
    %687 = vmatpush1.msra.mxu0 0.0
    %688 = vmatprep.subr.mxu0 0.0
    %689 = vmatpush1.msra.mxu0 0.0
    %690 = vmatprep.subr.mxu0 0.0
    %691 = vmatpush1.msra.mxu0 0.0
    %692 = vmatprep.subr.mxu0 0.0
    %693 = vmatpush1.msra.mxu0 0.0
    %694 = vmatprep.subr.mxu0 0.0
    %695 = vmatpush1.msra.mxu0 0.0
    %696 = vmatprep.subr.mxu0 0.0
    %697 = vmatpush1.msra.mxu0 0.0
    %698 = vmatprep.subr.mxu0 0.0
    %699 = vmatpush1.msra.mxu0 0.0
    %700 = vmatprep.subr.mxu0 0.0
    %701 = vmatpush1.msra.mxu0 0.0
    %702 = vmatprep.subr.mxu0 0.0
    %703 = vmatpush1.msra.mxu0 0.0
    %704 = vmatprep.subr.mxu0 0.0
    %705 = vmatpush1.msra.mxu0 0.0
    %706 = vmatprep.subr.mxu0 0.0
    %707 = vmatpush1.msra.mxu0 0.0
    %708 = vmatprep.subr.mxu0 0.0
    %709 = vmatpush1.msra.mxu0 0.0
    %710 = vmatprep.subr.mxu0 0.0
    %711 = vmatpush1.msra.mxu0 0.0
    %712 = vmatprep.subr.mxu0 0.0
    %713 = vmatpush1.msra.mxu0 0.0
    %714 = vmatprep.subr.mxu0 0.0
    %715 = vmatpush1.msra.mxu0 0.0
    %716 = vmatprep.subr.mxu0 0.0
    %717 = vmatpush1.msra.mxu0 0.0
    %718 = vmatprep.subr.mxu0 0.0
    %719 = vmatpush1.msra.mxu0 0.0
    %720 = vmatprep.subr.mxu0 0.0
    %721 = vmatpush1.msra.mxu0 0.0
    %722 = vmatprep.subr.mxu0 0.0
    %723 = vmatpush1.msra.mxu0 0.0
    %724 = vmatprep.subr.mxu0 0.0
    %725 = vmatpush1.msra.mxu0 0.0
    %726 = vmatprep.mubr.f32.mxu0 0.0
    %727 = vmatmul.mubr.f32.gmra.mrb[0].mxu0 %v657
    %v728 = vpop.f32.mrb[0].mxu0
    %v729 = vadd.f32 %v644, %v728
    %v730 = vpop.f32.mrb[0].mxu0
    %731 = vmatprep.mubr.f32.mxu0 0.0
    %732 = vmatmul.mubr.f32.gmra.mrb[0].mxu0 %v660
    %v733 = vpop.f32.mrb[0].mxu0
    %v734 = vadd.f32 %v649, %v733
    %v735 = vpop.f32.mrb[0].mxu0
    %736 = vdwg.mxu0
    %737 = vrot.lane.b32.xlu0 %v149, 80
    %v738 = vpop.permute.xlu0 %737
    %739 = vrot.lane.b32.xlu0 %v154, 80
    %v740 = vpop.permute.xlu0 %739
    %741 = vrot.lane.b32.xlu0 %v149, 72
    %v742 = vpop.permute.xlu0 %741
    %743 = vrot.lane.b32.xlu0 %v154, 72
    %v744 = vpop.permute.xlu0 %743
    %v745 = vsel %vm163, %v738, 0
    %v747 = vsel %vm163, %v740, 0
    %v749 = vsel %vm163, %v742, 0
    %v751 = vsel %vm163, %v744, 0
    %753 = vmatprep.subr.mxu0 0.0
    %754 = vmatpush1.xpose.msra.mxu0 %v749
    %755 = vmatprep.subr.mxu0 0.0
    %756 = vmatpush1.xpose.msra.mxu0 %v751
    %757 = vmatprep.subr.mxu0 0.0
    %758 = vmatpush1.xpose.msra.mxu0 0.0
    %759 = vmatprep.subr.mxu0 0.0
    %760 = vmatpush1.xpose.msra.mxu0 0.0
    %761 = vmatprep.subr.mxu0 0.0
    %762 = vmatpush1.xpose.msra.mxu0 0.0
    %763 = vmatprep.subr.mxu0 0.0
    %764 = vmatpush1.xpose.msra.mxu0 0.0
    %765 = vmatprep.subr.mxu0 0.0
    %766 = vmatpush1.xpose.msra.mxu0 0.0
    %767 = vmatprep.subr.mxu0 0.0
    %768 = vmatpush1.xpose.msra.mxu0 0.0
    %769 = vmatprep.subr.mxu0 0.0
    %770 = vmatpush1.xpose.msra.mxu0 0.0
    %771 = vmatprep.subr.mxu0 0.0
    %772 = vmatpush1.xpose.msra.mxu0 0.0
    %773 = vmatprep.subr.mxu0 0.0
    %774 = vmatpush1.xpose.msra.mxu0 0.0
    %775 = vmatprep.subr.mxu0 0.0
    %776 = vmatpush1.xpose.msra.mxu0 0.0
    %777 = vmatprep.subr.mxu0 0.0
    %778 = vmatpush1.xpose.msra.mxu0 0.0
    %779 = vmatprep.subr.mxu0 0.0
    %780 = vmatpush1.xpose.msra.mxu0 0.0
    %781 = vmatprep.subr.mxu0 0.0
    %782 = vmatpush1.xpose.msra.mxu0 0.0
    %783 = vmatprep.subr.mxu0 0.0
    %784 = vmatpush1.xpose.msra.mxu0 0.0
    %785 = vmatprep.subr.mxu0 0.0
    %786 = vmatpush1.xpose.msra.mxu0 0.0
    %787 = vmatprep.subr.mxu0 0.0
    %788 = vmatpush1.xpose.msra.mxu0 0.0
    %789 = vmatprep.subr.mxu0 0.0
    %790 = vmatpush1.xpose.msra.mxu0 0.0
    %791 = vmatprep.subr.mxu0 0.0
    %792 = vmatpush1.xpose.msra.mxu0 0.0
    %793 = vmatprep.subr.mxu0 0.0
    %794 = vmatpush1.xpose.msra.mxu0 0.0
    %795 = vmatprep.subr.mxu0 0.0
    %796 = vmatpush1.xpose.msra.mxu0 0.0
    %797 = vmatprep.subr.mxu0 0.0
    %798 = vmatpush1.xpose.msra.mxu0 0.0
    %799 = vmatprep.subr.mxu0 0.0
    %800 = vmatpush1.xpose.msra.mxu0 0.0
    %801 = vmatprep.subr.mxu0 0.0
    %802 = vmatpush1.xpose.msra.mxu0 0.0
    %803 = vmatprep.subr.mxu0 0.0
    %804 = vmatpush1.xpose.msra.mxu0 0.0
    %805 = vmatprep.subr.mxu0 0.0
    %806 = vmatpush1.xpose.msra.mxu0 0.0
    %807 = vmatprep.subr.mxu0 0.0
    %808 = vmatpush1.xpose.msra.mxu0 0.0
    %809 = vmatprep.subr.mxu0 0.0
    %810 = vmatpush1.xpose.msra.mxu0 0.0
    %811 = vmatprep.subr.mxu0 0.0
    %812 = vmatpush1.xpose.msra.mxu0 0.0
    %813 = vmatprep.subr.mxu0 0.0
    %814 = vmatpush1.xpose.msra.mxu0 0.0
    %815 = vmatprep.subr.mxu0 0.0
    %816 = vmatpush1.xpose.msra.mxu0 0.0
    %817 = vmatprep.mubr.f32.mxu0 0.0
    %818 = vmatmul.mubr.f32.gmra.mrb[0].mxu0 %v745
    %v819 = vpop.f32.mrb[0].mxu0
    %v820 = vadd.f32 0.0, %v819
    %v821 = vpop.f32.mrb[0].mxu0
    %822 = vmatprep.mubr.f32.mxu0 0.0
    %823 = vmatmul.mubr.f32.gmra.mrb[0].mxu0 %v747
    %v824 = vpop.f32.mrb[0].mxu0
    %v825 = vadd.f32 0.0, %v824
    %v826 = vpop.f32.mrb[0].mxu0
    %827 = vdwg.mxu0
    %v828 = vmul.f32 %v820, 0.35355338
    %v829 = vmul.f32 %v825, 0.35355338
    %v830 = vadd.f32 %v828, %v23
    %v831 = vadd.f32 %v829, %v24
    %v832 = vsel %vm251, %v830, -inf
    %833 = vmax.xlane.f32.xlu0 %v832
    %v834 = vpop.xlane.xlu0 %833
    %v835 = vsel %vm251, %v831, -inf
    %836 = vmax.xlane.f32.xlu0 %v835
    %v837 = vpop.xlane.xlu0 %836
    %v838 = vsub.f32 %v830, %v834
    %v839 = vsub.f32 %v831, %v837
    %v840 = vmul.f32 %v838, 1.442695
    %v841 = vpow.pop %v840
    %v842 = vmul.f32 %v839, 1.442695
    %v843 = vpow.pop %v842
    %v844 = vsel %vm251, %v841, 0.0
    %845 = vadd.xlane.f32.xlu0 %v844
    %v846 = vpop.xlane.xlu0 %845
    %v847 = vsel %vm251, %v843, 0.0
    %848 = vadd.xlane.f32.xlu0 %v847
    %v849 = vpop.xlane.xlu0 %848
    %v850 = vrcp.pop %v846
    %v851 = vrcp.pop %v849
    %v852 = vmul.f32 %v841, %v850
    %v853 = vmul.f32 %v843, %v851
    %854 = vrot.lane.b32.xlu0 %v149, 64
    %v855 = vpop.permute.xlu0 %854
    %856 = vrot.lane.b32.xlu0 %v154, 64
    %v857 = vpop.permute.xlu0 %856
    %v861 = vsel %vm251, %v852, 0
    %v864 = vsel %vm251, %v853, 0
    %866 = vmatprep.subr.mxu0 0.0
    %867 = vmatpush1.msra.mxu0 %v855
    %868 = vmatprep.subr.mxu0 0.0
    %869 = vmatpush1.msra.mxu0 %v857
    %870 = vmatprep.subr.mxu0 0.0
    %871 = vmatpush1.msra.mxu0 0.0
    %872 = vmatprep.subr.mxu0 0.0
    %873 = vmatpush1.msra.mxu0 0.0
    %874 = vmatprep.subr.mxu0 0.0
    %875 = vmatpush1.msra.mxu0 0.0
    %876 = vmatprep.subr.mxu0 0.0
    %877 = vmatpush1.msra.mxu0 0.0
    %878 = vmatprep.subr.mxu0 0.0
    %879 = vmatpush1.msra.mxu0 0.0
    %880 = vmatprep.subr.mxu0 0.0
    %881 = vmatpush1.msra.mxu0 0.0
    %882 = vmatprep.subr.mxu0 0.0
    %883 = vmatpush1.msra.mxu0 0.0
    %884 = vmatprep.subr.mxu0 0.0
    %885 = vmatpush1.msra.mxu0 0.0
    %886 = vmatprep.subr.mxu0 0.0
    %887 = vmatpush1.msra.mxu0 0.0
    %888 = vmatprep.subr.mxu0 0.0
    %889 = vmatpush1.msra.mxu0 0.0
    %890 = vmatprep.subr.mxu0 0.0
    %891 = vmatpush1.msra.mxu0 0.0
    %892 = vmatprep.subr.mxu0 0.0
    %893 = vmatpush1.msra.mxu0 0.0
    %894 = vmatprep.subr.mxu0 0.0
    %895 = vmatpush1.msra.mxu0 0.0
    %896 = vmatprep.subr.mxu0 0.0
    %897 = vmatpush1.msra.mxu0 0.0
    %898 = vmatprep.subr.mxu0 0.0
    %899 = vmatpush1.msra.mxu0 0.0
    %900 = vmatprep.subr.mxu0 0.0
    %901 = vmatpush1.msra.mxu0 0.0
    %902 = vmatprep.subr.mxu0 0.0
    %903 = vmatpush1.msra.mxu0 0.0
    %904 = vmatprep.subr.mxu0 0.0
    %905 = vmatpush1.msra.mxu0 0.0
    %906 = vmatprep.subr.mxu0 0.0
    %907 = vmatpush1.msra.mxu0 0.0
    %908 = vmatprep.subr.mxu0 0.0
    %909 = vmatpush1.msra.mxu0 0.0
    %910 = vmatprep.subr.mxu0 0.0
    %911 = vmatpush1.msra.mxu0 0.0
    %912 = vmatprep.subr.mxu0 0.0
    %913 = vmatpush1.msra.mxu0 0.0
    %914 = vmatprep.subr.mxu0 0.0
    %915 = vmatpush1.msra.mxu0 0.0
    %916 = vmatprep.subr.mxu0 0.0
    %917 = vmatpush1.msra.mxu0 0.0
    %918 = vmatprep.subr.mxu0 0.0
    %919 = vmatpush1.msra.mxu0 0.0
    %920 = vmatprep.subr.mxu0 0.0
    %921 = vmatpush1.msra.mxu0 0.0
    %922 = vmatprep.subr.mxu0 0.0
    %923 = vmatpush1.msra.mxu0 0.0
    %924 = vmatprep.subr.mxu0 0.0
    %925 = vmatpush1.msra.mxu0 0.0
    %926 = vmatprep.subr.mxu0 0.0
    %927 = vmatpush1.msra.mxu0 0.0
    %928 = vmatprep.subr.mxu0 0.0
    %929 = vmatpush1.msra.mxu0 0.0
    %930 = vmatprep.mubr.f32.mxu0 0.0
    %931 = vmatmul.mubr.f32.gmra.mrb[0].mxu0 %v861
    %v932 = vpop.f32.mrb[0].mxu0
    %v933 = vadd.f32 0.0, %v932
    %v934 = vpop.f32.mrb[0].mxu0
    %935 = vmatprep.mubr.f32.mxu0 0.0
    %936 = vmatmul.mubr.f32.gmra.mrb[0].mxu0 %v864
    %v937 = vpop.f32.mrb[0].mxu0
    %v938 = vadd.f32 0.0, %v937
    %v939 = vpop.f32.mrb[0].mxu0
    %940 = vdwg.mxu0
    %v941 = vld [vmem:[%s1 + $0x20] sm:$0xff]
    %943 = vrot.lane.b32.xlu0 %v941, 32
    %v944 = vpop.permute.xlu0 %943
    %v947 = vsel %vm163, %v933, 0
    %v950 = vsel %vm163, %v938, 0
    %952 = vmatprep.subr.mxu0 0.0
    %953 = vmatpush1.msra.mxu0 %v944
    %954 = vmatprep.subr.mxu0 0.0
    %955 = vmatpush1.msra.mxu0 0.0
    %956 = vmatprep.subr.mxu0 0.0
    %957 = vmatpush1.msra.mxu0 0.0
    %958 = vmatprep.subr.mxu0 0.0
    %959 = vmatpush1.msra.mxu0 0.0
    %960 = vmatprep.subr.mxu0 0.0
    %961 = vmatpush1.msra.mxu0 0.0
    %962 = vmatprep.subr.mxu0 0.0
    %963 = vmatpush1.msra.mxu0 0.0
    %964 = vmatprep.subr.mxu0 0.0
    %965 = vmatpush1.msra.mxu0 0.0
    %966 = vmatprep.subr.mxu0 0.0
    %967 = vmatpush1.msra.mxu0 0.0
    %968 = vmatprep.subr.mxu0 0.0
    %969 = vmatpush1.msra.mxu0 0.0
    %970 = vmatprep.subr.mxu0 0.0
    %971 = vmatpush1.msra.mxu0 0.0
    %972 = vmatprep.subr.mxu0 0.0
    %973 = vmatpush1.msra.mxu0 0.0
    %974 = vmatprep.subr.mxu0 0.0
    %975 = vmatpush1.msra.mxu0 0.0
    %976 = vmatprep.subr.mxu0 0.0
    %977 = vmatpush1.msra.mxu0 0.0
    %978 = vmatprep.subr.mxu0 0.0
    %979 = vmatpush1.msra.mxu0 0.0
    %980 = vmatprep.subr.mxu0 0.0
    %981 = vmatpush1.msra.mxu0 0.0
    %982 = vmatprep.subr.mxu0 0.0
    %983 = vmatpush1.msra.mxu0 0.0
    %984 = vmatprep.subr.mxu0 0.0
    %985 = vmatpush1.msra.mxu0 0.0
    %986 = vmatprep.subr.mxu0 0.0
    %987 = vmatpush1.msra.mxu0 0.0
    %988 = vmatprep.subr.mxu0 0.0
    %989 = vmatpush1.msra.mxu0 0.0
    %990 = vmatprep.subr.mxu0 0.0
    %991 = vmatpush1.msra.mxu0 0.0
    %992 = vmatprep.subr.mxu0 0.0
    %993 = vmatpush1.msra.mxu0 0.0
    %994 = vmatprep.subr.mxu0 0.0
    %995 = vmatpush1.msra.mxu0 0.0
    %996 = vmatprep.subr.mxu0 0.0
    %997 = vmatpush1.msra.mxu0 0.0
    %998 = vmatprep.subr.mxu0 0.0
    %999 = vmatpush1.msra.mxu0 0.0
    %1000 = vmatprep.subr.mxu0 0.0
    %1001 = vmatpush1.msra.mxu0 0.0
    %1002 = vmatprep.subr.mxu0 0.0
    %1003 = vmatpush1.msra.mxu0 0.0
    %1004 = vmatprep.subr.mxu0 0.0
    %1005 = vmatpush1.msra.mxu0 0.0
    %1006 = vmatprep.subr.mxu0 0.0
    %1007 = vmatpush1.msra.mxu0 0.0
    %1008 = vmatprep.subr.mxu0 0.0
    %1009 = vmatpush1.msra.mxu0 0.0
    %1010 = vmatprep.subr.mxu0 0.0
    %1011 = vmatpush1.msra.mxu0 0.0
    %1012 = vmatprep.subr.mxu0 0.0
    %1013 = vmatpush1.msra.mxu0 0.0
    %1014 = vmatprep.subr.mxu0 0.0
    %1015 = vmatpush1.msra.mxu0 0.0
    %1016 = vmatprep.mubr.f32.mxu0 0.0
    %1017 = vmatmul.mubr.f32.gmra.mrb[0].mxu0 %v947
    %v1018 = vpop.f32.mrb[0].mxu0
    %v1019 = vadd.f32 0.0, %v1018
    %v1020 = vpop.f32.mrb[0].mxu0
    %1021 = vmatprep.mubr.f32.mxu0 0.0
    %1022 = vmatmul.mubr.f32.gmra.mrb[0].mxu0 %v950
    %v1023 = vpop.f32.mrb[0].mxu0
    %v1024 = vadd.f32 0.0, %v1023
    %v1025 = vpop.f32.mrb[0].mxu0
    %1026 = vdwg.mxu0
    %v1027 = vadd.f32 %v729, %v1019
    %v1028 = vadd.f32 %v734, %v1024
    %1029 = vrot.lane.b32.xlu0 %v149, 56
    %v1030 = vpop.permute.xlu0 %1029
    %1031 = vrot.lane.b32.xlu0 %v154, 56
    %v1032 = vpop.permute.xlu0 %1031
    %1033 = vrot.lane.b32.xlu0 %v149, 48
    %v1034 = vpop.permute.xlu0 %1033
    %1035 = vrot.lane.b32.xlu0 %v154, 48
    %v1036 = vpop.permute.xlu0 %1035
    %v1037 = vsel %vm163, %v1030, 0
    %v1039 = vsel %vm163, %v1032, 0
    %v1041 = vsel %vm163, %v1034, 0
    %v1043 = vsel %vm163, %v1036, 0
    %1045 = vmatprep.subr.mxu0 0.0
    %1046 = vmatpush1.xpose.msra.mxu0 %v1041
    %1047 = vmatprep.subr.mxu0 0.0
    %1048 = vmatpush1.xpose.msra.mxu0 %v1043
    %1049 = vmatprep.subr.mxu0 0.0
    %1050 = vmatpush1.xpose.msra.mxu0 0.0
    %1051 = vmatprep.subr.mxu0 0.0
    %1052 = vmatpush1.xpose.msra.mxu0 0.0
    %1053 = vmatprep.subr.mxu0 0.0
    %1054 = vmatpush1.xpose.msra.mxu0 0.0
    %1055 = vmatprep.subr.mxu0 0.0
    %1056 = vmatpush1.xpose.msra.mxu0 0.0
    %1057 = vmatprep.subr.mxu0 0.0
    %1058 = vmatpush1.xpose.msra.mxu0 0.0
    %1059 = vmatprep.subr.mxu0 0.0
    %1060 = vmatpush1.xpose.msra.mxu0 0.0
    %1061 = vmatprep.subr.mxu0 0.0
    %1062 = vmatpush1.xpose.msra.mxu0 0.0
    %1063 = vmatprep.subr.mxu0 0.0
    %1064 = vmatpush1.xpose.msra.mxu0 0.0
    %1065 = vmatprep.subr.mxu0 0.0
    %1066 = vmatpush1.xpose.msra.mxu0 0.0
    %1067 = vmatprep.subr.mxu0 0.0
    %1068 = vmatpush1.xpose.msra.mxu0 0.0
    %1069 = vmatprep.subr.mxu0 0.0
    %1070 = vmatpush1.xpose.msra.mxu0 0.0
    %1071 = vmatprep.subr.mxu0 0.0
    %1072 = vmatpush1.xpose.msra.mxu0 0.0
    %1073 = vmatprep.subr.mxu0 0.0
    %1074 = vmatpush1.xpose.msra.mxu0 0.0
    %1075 = vmatprep.subr.mxu0 0.0
    %1076 = vmatpush1.xpose.msra.mxu0 0.0
    %1077 = vmatprep.subr.mxu0 0.0
    %1078 = vmatpush1.xpose.msra.mxu0 0.0
    %1079 = vmatprep.subr.mxu0 0.0
    %1080 = vmatpush1.xpose.msra.mxu0 0.0
    %1081 = vmatprep.subr.mxu0 0.0
    %1082 = vmatpush1.xpose.msra.mxu0 0.0
    %1083 = vmatprep.subr.mxu0 0.0
    %1084 = vmatpush1.xpose.msra.mxu0 0.0
    %1085 = vmatprep.subr.mxu0 0.0
    %1086 = vmatpush1.xpose.msra.mxu0 0.0
    %1087 = vmatprep.subr.mxu0 0.0
    %1088 = vmatpush1.xpose.msra.mxu0 0.0
    %1089 = vmatprep.subr.mxu0 0.0
    %1090 = vmatpush1.xpose.msra.mxu0 0.0
    %1091 = vmatprep.subr.mxu0 0.0
    %1092 = vmatpush1.xpose.msra.mxu0 0.0
    %1093 = vmatprep.subr.mxu0 0.0
    %1094 = vmatpush1.xpose.msra.mxu0 0.0
    %1095 = vmatprep.subr.mxu0 0.0
    %1096 = vmatpush1.xpose.msra.mxu0 0.0
    %1097 = vmatprep.subr.mxu0 0.0
    %1098 = vmatpush1.xpose.msra.mxu0 0.0
    %1099 = vmatprep.subr.mxu0 0.0
    %1100 = vmatpush1.xpose.msra.mxu0 0.0
    %1101 = vmatprep.subr.mxu0 0.0
    %1102 = vmatpush1.xpose.msra.mxu0 0.0
    %1103 = vmatprep.subr.mxu0 0.0
    %1104 = vmatpush1.xpose.msra.mxu0 0.0
    %1105 = vmatprep.subr.mxu0 0.0
    %1106 = vmatpush1.xpose.msra.mxu0 0.0
    %1107 = vmatprep.subr.mxu0 0.0
    %1108 = vmatpush1.xpose.msra.mxu0 0.0
    %1109 = vmatprep.mubr.f32.mxu0 0.0
    %1110 = vmatmul.mubr.f32.gmra.mrb[0].mxu0 %v1037
    %v1111 = vpop.f32.mrb[0].mxu0
    %v1112 = vadd.f32 0.0, %v1111
    %v1113 = vpop.f32.mrb[0].mxu0
    %1114 = vmatprep.mubr.f32.mxu0 0.0
    %1115 = vmatmul.mubr.f32.gmra.mrb[0].mxu0 %v1039
    %v1116 = vpop.f32.mrb[0].mxu0
    %v1117 = vadd.f32 0.0, %v1116
    %v1118 = vpop.f32.mrb[0].mxu0
    %1119 = vdwg.mxu0
    %v1120 = vmul.f32 %v1112, 0.35355338
    %v1121 = vmul.f32 %v1117, 0.35355338
    %v1122 = vadd.f32 %v1120, %v23
    %v1123 = vadd.f32 %v1121, %v24
    %v1124 = vsel %vm251, %v1122, -inf
    %1125 = vmax.xlane.f32.xlu0 %v1124
    %v1126 = vpop.xlane.xlu0 %1125
    %v1127 = vsel %vm251, %v1123, -inf
    %1128 = vmax.xlane.f32.xlu0 %v1127
    %v1129 = vpop.xlane.xlu0 %1128
    %v1130 = vsub.f32 %v1122, %v1126
    %v1131 = vsub.f32 %v1123, %v1129
    %v1132 = vmul.f32 %v1130, 1.442695
    %v1133 = vpow.pop %v1132
    %v1134 = vmul.f32 %v1131, 1.442695
    %v1135 = vpow.pop %v1134
    %v1136 = vsel %vm251, %v1133, 0.0
    %1137 = vadd.xlane.f32.xlu0 %v1136
    %v1138 = vpop.xlane.xlu0 %1137
    %v1139 = vsel %vm251, %v1135, 0.0
    %1140 = vadd.xlane.f32.xlu0 %v1139
    %v1141 = vpop.xlane.xlu0 %1140
    %v1142 = vrcp.pop %v1138
    %v1143 = vrcp.pop %v1141
    %v1144 = vmul.f32 %v1133, %v1142
    %v1145 = vmul.f32 %v1135, %v1143
    %1146 = vrot.lane.b32.xlu0 %v149, 40
    %v1147 = vpop.permute.xlu0 %1146
    %1148 = vrot.lane.b32.xlu0 %v154, 40
    %v1149 = vpop.permute.xlu0 %1148
    %v1153 = vsel %vm251, %v1144, 0
    %v1156 = vsel %vm251, %v1145, 0
    %1158 = vmatprep.subr.mxu0 0.0
    %1159 = vmatpush1.msra.mxu0 %v1147
    %1160 = vmatprep.subr.mxu0 0.0
    %1161 = vmatpush1.msra.mxu0 %v1149
    %1162 = vmatprep.subr.mxu0 0.0
    %1163 = vmatpush1.msra.mxu0 0.0
    %1164 = vmatprep.subr.mxu0 0.0
    %1165 = vmatpush1.msra.mxu0 0.0
    %1166 = vmatprep.subr.mxu0 0.0
    %1167 = vmatpush1.msra.mxu0 0.0
    %1168 = vmatprep.subr.mxu0 0.0
    %1169 = vmatpush1.msra.mxu0 0.0
    %1170 = vmatprep.subr.mxu0 0.0
    %1171 = vmatpush1.msra.mxu0 0.0
    %1172 = vmatprep.subr.mxu0 0.0
    %1173 = vmatpush1.msra.mxu0 0.0
    %1174 = vmatprep.subr.mxu0 0.0
    %1175 = vmatpush1.msra.mxu0 0.0
    %1176 = vmatprep.subr.mxu0 0.0
    %1177 = vmatpush1.msra.mxu0 0.0
    %1178 = vmatprep.subr.mxu0 0.0
    %1179 = vmatpush1.msra.mxu0 0.0
    %1180 = vmatprep.subr.mxu0 0.0
    %1181 = vmatpush1.msra.mxu0 0.0
    %1182 = vmatprep.subr.mxu0 0.0
    %1183 = vmatpush1.msra.mxu0 0.0
    %1184 = vmatprep.subr.mxu0 0.0
    %1185 = vmatpush1.msra.mxu0 0.0
    %1186 = vmatprep.subr.mxu0 0.0
    %1187 = vmatpush1.msra.mxu0 0.0
    %1188 = vmatprep.subr.mxu0 0.0
    %1189 = vmatpush1.msra.mxu0 0.0
    %1190 = vmatprep.subr.mxu0 0.0
    %1191 = vmatpush1.msra.mxu0 0.0
    %1192 = vmatprep.subr.mxu0 0.0
    %1193 = vmatpush1.msra.mxu0 0.0
    %1194 = vmatprep.subr.mxu0 0.0
    %1195 = vmatpush1.msra.mxu0 0.0
    %1196 = vmatprep.subr.mxu0 0.0
    %1197 = vmatpush1.msra.mxu0 0.0
    %1198 = vmatprep.subr.mxu0 0.0
    %1199 = vmatpush1.msra.mxu0 0.0
    %1200 = vmatprep.subr.mxu0 0.0
    %1201 = vmatpush1.msra.mxu0 0.0
    %1202 = vmatprep.subr.mxu0 0.0
    %1203 = vmatpush1.msra.mxu0 0.0
    %1204 = vmatprep.subr.mxu0 0.0
    %1205 = vmatpush1.msra.mxu0 0.0
    %1206 = vmatprep.subr.mxu0 0.0
    %1207 = vmatpush1.msra.mxu0 0.0
    %1208 = vmatprep.subr.mxu0 0.0
    %1209 = vmatpush1.msra.mxu0 0.0
    %1210 = vmatprep.subr.mxu0 0.0
    %1211 = vmatpush1.msra.mxu0 0.0
    %1212 = vmatprep.subr.mxu0 0.0
    %1213 = vmatpush1.msra.mxu0 0.0
    %1214 = vmatprep.subr.mxu0 0.0
    %1215 = vmatpush1.msra.mxu0 0.0
    %1216 = vmatprep.subr.mxu0 0.0
    %1217 = vmatpush1.msra.mxu0 0.0
    %1218 = vmatprep.subr.mxu0 0.0
    %1219 = vmatpush1.msra.mxu0 0.0
    %1220 = vmatprep.subr.mxu0 0.0
    %1221 = vmatpush1.msra.mxu0 0.0
    %1222 = vmatprep.mubr.f32.mxu0 0.0
    %1223 = vmatmul.mubr.f32.gmra.mrb[0].mxu0 %v1153
    %v1224 = vpop.f32.mrb[0].mxu0
    %v1225 = vadd.f32 0.0, %v1224
    %v1226 = vpop.f32.mrb[0].mxu0
    %1227 = vmatprep.mubr.f32.mxu0 0.0
    %1228 = vmatmul.mubr.f32.gmra.mrb[0].mxu0 %v1156
    %v1229 = vpop.f32.mrb[0].mxu0
    %v1230 = vadd.f32 0.0, %v1229
    %v1231 = vpop.f32.mrb[0].mxu0
    %1232 = vdwg.mxu0
    %1234 = vrot.lane.b32.xlu0 %v75, 32
    %v1235 = vpop.permute.xlu0 %1234
    %v1238 = vsel %vm163, %v1225, 0
    %v1241 = vsel %vm163, %v1230, 0
    %1243 = vmatprep.subr.mxu0 0.0
    %1244 = vmatpush1.msra.mxu0 %v1235
    %1245 = vmatprep.subr.mxu0 0.0
    %1246 = vmatpush1.msra.mxu0 0.0
    %1247 = vmatprep.subr.mxu0 0.0
    %1248 = vmatpush1.msra.mxu0 0.0
    %1249 = vmatprep.subr.mxu0 0.0
    %1250 = vmatpush1.msra.mxu0 0.0
    %1251 = vmatprep.subr.mxu0 0.0
    %1252 = vmatpush1.msra.mxu0 0.0
    %1253 = vmatprep.subr.mxu0 0.0
    %1254 = vmatpush1.msra.mxu0 0.0
    %1255 = vmatprep.subr.mxu0 0.0
    %1256 = vmatpush1.msra.mxu0 0.0
    %1257 = vmatprep.subr.mxu0 0.0
    %1258 = vmatpush1.msra.mxu0 0.0
    %1259 = vmatprep.subr.mxu0 0.0
    %1260 = vmatpush1.msra.mxu0 0.0
    %1261 = vmatprep.subr.mxu0 0.0
    %1262 = vmatpush1.msra.mxu0 0.0
    %1263 = vmatprep.subr.mxu0 0.0
    %1264 = vmatpush1.msra.mxu0 0.0
    %1265 = vmatprep.subr.mxu0 0.0
    %1266 = vmatpush1.msra.mxu0 0.0
    %1267 = vmatprep.subr.mxu0 0.0
    %1268 = vmatpush1.msra.mxu0 0.0
    %1269 = vmatprep.subr.mxu0 0.0
    %1270 = vmatpush1.msra.mxu0 0.0
    %1271 = vmatprep.subr.mxu0 0.0
    %1272 = vmatpush1.msra.mxu0 0.0
    %1273 = vmatprep.subr.mxu0 0.0
    %1274 = vmatpush1.msra.mxu0 0.0
    %1275 = vmatprep.subr.mxu0 0.0
    %1276 = vmatpush1.msra.mxu0 0.0
    %1277 = vmatprep.subr.mxu0 0.0
    %1278 = vmatpush1.msra.mxu0 0.0
    %1279 = vmatprep.subr.mxu0 0.0
    %1280 = vmatpush1.msra.mxu0 0.0
    %1281 = vmatprep.subr.mxu0 0.0
    %1282 = vmatpush1.msra.mxu0 0.0
    %1283 = vmatprep.subr.mxu0 0.0
    %1284 = vmatpush1.msra.mxu0 0.0
    %1285 = vmatprep.subr.mxu0 0.0
    %1286 = vmatpush1.msra.mxu0 0.0
    %1287 = vmatprep.subr.mxu0 0.0
    %1288 = vmatpush1.msra.mxu0 0.0
    %1289 = vmatprep.subr.mxu0 0.0
    %1290 = vmatpush1.msra.mxu0 0.0
    %1291 = vmatprep.subr.mxu0 0.0
    %1292 = vmatpush1.msra.mxu0 0.0
    %1293 = vmatprep.subr.mxu0 0.0
    %1294 = vmatpush1.msra.mxu0 0.0
    %1295 = vmatprep.subr.mxu0 0.0
    %1296 = vmatpush1.msra.mxu0 0.0
    %1297 = vmatprep.subr.mxu0 0.0
    %1298 = vmatpush1.msra.mxu0 0.0
    %1299 = vmatprep.subr.mxu0 0.0
    %1300 = vmatpush1.msra.mxu0 0.0
    %1301 = vmatprep.subr.mxu0 0.0
    %1302 = vmatpush1.msra.mxu0 0.0
    %1303 = vmatprep.subr.mxu0 0.0
    %1304 = vmatpush1.msra.mxu0 0.0
    %1305 = vmatprep.subr.mxu0 0.0
    %1306 = vmatpush1.msra.mxu0 0.0
    %1307 = vmatprep.mubr.f32.mxu0 0.0
    %1308 = vmatmul.mubr.f32.gmra.mrb[0].mxu0 %v1238
    %v1309 = vpop.f32.mrb[0].mxu0
    %v1310 = vadd.f32 0.0, %v1309
    %v1311 = vpop.f32.mrb[0].mxu0
    %1312 = vmatprep.mubr.f32.mxu0 0.0
    %1313 = vmatmul.mubr.f32.gmra.mrb[0].mxu0 %v1241
    %v1314 = vpop.f32.mrb[0].mxu0
    %v1315 = vadd.f32 0.0, %v1314
    %v1316 = vpop.f32.mrb[0].mxu0
    %1317 = vdwg.mxu0
    %v1318 = vadd.f32 %v1027, %v1310
    %v1319 = vadd.f32 %v1028, %v1315
    %v1320 = vadd.f32 %v21, %v1318
    %v1321 = vadd.f32 %v22, %v1319
    %v1322 = vlaneseq
    %v1323 = vshrl.u32 %v1322, 7
    %v1324 = vsub.s32 0, %v1323
    %v1325 = vrot.slane %v29, %v1324
    %v1326 = vadd.f32 %v1320, %v1325
    %v1327 = vadd.f32 %v1321, %v1325
    %v1328 = vsel %vm32, %v1326, 0.0
    %1329 = vadd.xlane.f32.xlu0 %v1328
    %v1330 = vpop.xlane.xlu0 %1329
    %v1331 = vsel %vm32, %v1327, 0.0
    %1332 = vadd.xlane.f32.xlu0 %v1331
    %v1333 = vpop.xlane.xlu0 %1332
    %v1334 = vmul.f32 %v1330, %v39
    %v1335 = vmul.f32 %v1333, %v39
    %v1336 = vsub.f32 %v1326, %v1334
    %v1337 = vsub.f32 %v1327, %v1335
    %v1338 = vmul.f32 %v1336, %v1336
    %v1339 = vmul.f32 %v1337, %v1337
    %v1340 = vsel %vm32, %v1338, 0.0
    %1341 = vadd.xlane.f32.xlu0 %v1340
    %v1342 = vpop.xlane.xlu0 %1341
    %v1343 = vsel %vm32, %v1339, 0.0
    %1344 = vadd.xlane.f32.xlu0 %v1343
    %v1345 = vpop.xlane.xlu0 %1344
    %v1346 = vmul.f32 %v1342, %v39
    %v1347 = vmul.f32 %v1345, %v39
    %v1348 = vadd.f32 %v1346, 1e-05
    %v1349 = vadd.f32 %v1347, 1e-05
    %v1350 = vrsqrt.pop %v1348
    %v1351 = vrsqrt.pop %v1349
    %v1352 = vmul.f32 %v1336, %v1350
    %v1353 = vmul.f32 %v1337, %v1351
    %v1354 = vlaneseq
    %v1355 = vshrl.u32 %v1354, 7
    %v1356 = vsub.s32 0, %v1355
    %v1357 = vrot.slane %v27, %v1356
    %v1358 = vmul.f32 %v1352, %v1357
    %v1359 = vmul.f32 %v1353, %v1357
    %v1360 = vlaneseq
    %v1361 = vshrl.u32 %v1360, 7
    %v1362 = vsub.s32 0, %v1361
    %v1363 = vrot.slane %v28, %v1362
    %v1364 = vadd.f32 %v1358, %v1363
    %v1365 = vadd.f32 %v1359, %v1363
    %v1366 = vld [vmem:[%s1 + $0x8] sm:$0xff]
    %v1367 = vld [vmem:[%s1 + $0x18] sm:$0xff]
    %v1368 = vld [vmem:[%s1 + $0x28] sm:$0xff]
    %v1369 = vld [vmem:[%s1 + $0x38] sm:$0xff]
    %v1370 = vlaneseq
    %v1371 = vshrl.u32 %v1370, 7
    %v1372 = vsub.s32 0, %v1371
    %v1373 = vrot.slane %v31, %v1372
    %v1375 = vsel %vm32, %v1364, 0
    %v1378 = vsel %vm32, %v1365, 0
    %1380 = vmatprep.subr.mxu0 0.0
    %1381 = vmatpush1.msra.mxu0 %v1366
    %1382 = vmatprep.subr.mxu0 0.0
    %1383 = vmatpush1.msra.mxu0 %v1367
    %1384 = vmatprep.subr.mxu0 0.0
    %1385 = vmatpush1.msra.mxu0 %v1368
    %1386 = vmatprep.subr.mxu0 0.0
    %1387 = vmatpush1.msra.mxu0 %v1369
    %1388 = vmatprep.subr.mxu0 0.0
    %1389 = vmatpush1.msra.mxu0 0.0
    %1390 = vmatprep.subr.mxu0 0.0
    %1391 = vmatpush1.msra.mxu0 0.0
    %1392 = vmatprep.subr.mxu0 0.0
    %1393 = vmatpush1.msra.mxu0 0.0
    %1394 = vmatprep.subr.mxu0 0.0
    %1395 = vmatpush1.msra.mxu0 0.0
    %1396 = vmatprep.subr.mxu0 0.0
    %1397 = vmatpush1.msra.mxu0 0.0
    %1398 = vmatprep.subr.mxu0 0.0
    %1399 = vmatpush1.msra.mxu0 0.0
    %1400 = vmatprep.subr.mxu0 0.0
    %1401 = vmatpush1.msra.mxu0 0.0
    %1402 = vmatprep.subr.mxu0 0.0
    %1403 = vmatpush1.msra.mxu0 0.0
    %1404 = vmatprep.subr.mxu0 0.0
    %1405 = vmatpush1.msra.mxu0 0.0
    %1406 = vmatprep.subr.mxu0 0.0
    %1407 = vmatpush1.msra.mxu0 0.0
    %1408 = vmatprep.subr.mxu0 0.0
    %1409 = vmatpush1.msra.mxu0 0.0
    %1410 = vmatprep.subr.mxu0 0.0
    %1411 = vmatpush1.msra.mxu0 0.0
    %1412 = vmatprep.subr.mxu0 0.0
    %1413 = vmatpush1.msra.mxu0 0.0
    %1414 = vmatprep.subr.mxu0 0.0
    %1415 = vmatpush1.msra.mxu0 0.0
    %1416 = vmatprep.subr.mxu0 0.0
    %1417 = vmatpush1.msra.mxu0 0.0
    %1418 = vmatprep.subr.mxu0 0.0
    %1419 = vmatpush1.msra.mxu0 0.0
    %1420 = vmatprep.subr.mxu0 0.0
    %1421 = vmatpush1.msra.mxu0 0.0
    %1422 = vmatprep.subr.mxu0 0.0
    %1423 = vmatpush1.msra.mxu0 0.0
    %1424 = vmatprep.subr.mxu0 0.0
    %1425 = vmatpush1.msra.mxu0 0.0
    %1426 = vmatprep.subr.mxu0 0.0
    %1427 = vmatpush1.msra.mxu0 0.0
    %1428 = vmatprep.subr.mxu0 0.0
    %1429 = vmatpush1.msra.mxu0 0.0
    %1430 = vmatprep.subr.mxu0 0.0
    %1431 = vmatpush1.msra.mxu0 0.0
    %1432 = vmatprep.subr.mxu0 0.0
    %1433 = vmatpush1.msra.mxu0 0.0
    %1434 = vmatprep.subr.mxu0 0.0
    %1435 = vmatpush1.msra.mxu0 0.0
    %1436 = vmatprep.subr.mxu0 0.0
    %1437 = vmatpush1.msra.mxu0 0.0
    %1438 = vmatprep.subr.mxu0 0.0
    %1439 = vmatpush1.msra.mxu0 0.0
    %1440 = vmatprep.subr.mxu0 0.0
    %1441 = vmatpush1.msra.mxu0 0.0
    %1442 = vmatprep.subr.mxu0 0.0
    %1443 = vmatpush1.msra.mxu0 0.0
    %1444 = vmatprep.mubr.f32.mxu0 0.0
    %1445 = vmatmul.mubr.f32.gmra.mrb[0].mxu0 %v1375
    %v1446 = vpop.f32.mrb[0].mxu0
    %v1447 = vadd.f32 %v1373, %v1446
    %v1448 = vpop.f32.mrb[0].mxu0
    %1449 = vmatprep.mubr.f32.mxu0 0.0
    %1450 = vmatmul.mubr.f32.gmra.mrb[0].mxu0 %v1378
    %v1451 = vpop.f32.mrb[0].mxu0
    %v1452 = vadd.f32 %v1373, %v1451
    %v1453 = vpop.f32.mrb[0].mxu0
    %1454 = vdwg.mxu0
    %v1455 = vmul.f32 %v1447, 0.5
    %v1456 = vmul.f32 %v1452, 0.5
    %v1457 = vmul.f32 %v1447, 0.70710677
    %v1458 = vmul.f32 %v1452, 0.70710677
    %v1459 = verf.f32.pop %v1457
    %v1460 = verf.f32.pop %v1458
    %v1461 = vadd.f32 %v1459, 1.0
    %v1462 = vadd.f32 %v1460, 1.0
    %v1463 = vmul.f32 %v1455, %v1461
    %v1464 = vmul.f32 %v1456, %v1462
    %v1465 = vld [vmem:[%s2] sm:$0xff]
    %v1466 = vld [vmem:[%s2 + $0x8] sm:$0xff]
    %v1467 = vld [vmem:[%s2 + $0x10] sm:$0xff]
    %v1468 = vld [vmem:[%s2 + $0x18] sm:$0xff]
    %v1469 = vld [vmem:[%s2 + $0x20] sm:$0xff]
    %v1470 = vld [vmem:[%s2 + $0x28] sm:$0xff]
    %v1471 = vld [vmem:[%s2 + $0x30] sm:$0xff]
    %v1472 = vld [vmem:[%s2 + $0x38] sm:$0xff]
    %v1473 = vld [vmem:[%s2 + $0x40] sm:$0xff]
    %v1474 = vld [vmem:[%s2 + $0x48] sm:$0xff]
    %v1475 = vld [vmem:[%s2 + $0x50] sm:$0xff]
    %v1476 = vld [vmem:[%s2 + $0x58] sm:$0xff]
    %v1477 = vld [vmem:[%s2 + $0x60] sm:$0xff]
    %v1478 = vld [vmem:[%s2 + $0x68] sm:$0xff]
    %v1479 = vld [vmem:[%s2 + $0x70] sm:$0xff]
    %v1480 = vld [vmem:[%s2 + $0x78] sm:$0xff]
    %v1481 = vlaneseq
    %v1482 = vshrl.u32 %v1481, 7
    %v1483 = vsub.s32 0, %v1482
    %v1484 = vrot.slane %v30, %v1483
    %1485 = vmatprep.subr.mxu0 0.0
    %1486 = vmatpush1.msra.mxu0 %v1465
    %1487 = vmatprep.subr.mxu0 0.0
    %1488 = vmatpush1.msra.mxu0 %v1466
    %1489 = vmatprep.subr.mxu0 0.0
    %1490 = vmatpush1.msra.mxu0 %v1467
    %1491 = vmatprep.subr.mxu0 0.0
    %1492 = vmatpush1.msra.mxu0 %v1468
    %1493 = vmatprep.subr.mxu0 0.0
    %1494 = vmatpush1.msra.mxu0 %v1469
    %1495 = vmatprep.subr.mxu0 0.0
    %1496 = vmatpush1.msra.mxu0 %v1470
    %1497 = vmatprep.subr.mxu0 0.0
    %1498 = vmatpush1.msra.mxu0 %v1471
    %1499 = vmatprep.subr.mxu0 0.0
    %1500 = vmatpush1.msra.mxu0 %v1472
    %1501 = vmatprep.subr.mxu0 0.0
    %1502 = vmatpush1.msra.mxu0 %v1473
    %1503 = vmatprep.subr.mxu0 0.0
    %1504 = vmatpush1.msra.mxu0 %v1474
    %1505 = vmatprep.subr.mxu0 0.0
    %1506 = vmatpush1.msra.mxu0 %v1475
    %1507 = vmatprep.subr.mxu0 0.0
    %1508 = vmatpush1.msra.mxu0 %v1476
    %1509 = vmatprep.subr.mxu0 0.0
    %1510 = vmatpush1.msra.mxu0 %v1477
    %1511 = vmatprep.subr.mxu0 0.0
    %1512 = vmatpush1.msra.mxu0 %v1478
    %1513 = vmatprep.subr.mxu0 0.0
    %1514 = vmatpush1.msra.mxu0 %v1479
    %1515 = vmatprep.subr.mxu0 0.0
    %1516 = vmatpush1.msra.mxu0 %v1480
    %1517 = vmatprep.subr.mxu0 0.0
    %1518 = vmatpush1.msra.mxu0 0.0
    %1519 = vmatprep.subr.mxu0 0.0
    %1520 = vmatpush1.msra.mxu0 0.0
    %1521 = vmatprep.subr.mxu0 0.0
    %1522 = vmatpush1.msra.mxu0 0.0
    %1523 = vmatprep.subr.mxu0 0.0
    %1524 = vmatpush1.msra.mxu0 0.0
    %1525 = vmatprep.subr.mxu0 0.0
    %1526 = vmatpush1.msra.mxu0 0.0
    %1527 = vmatprep.subr.mxu0 0.0
    %1528 = vmatpush1.msra.mxu0 0.0
    %1529 = vmatprep.subr.mxu0 0.0
    %1530 = vmatpush1.msra.mxu0 0.0
    %1531 = vmatprep.subr.mxu0 0.0
    %1532 = vmatpush1.msra.mxu0 0.0
    %1533 = vmatprep.subr.mxu0 0.0
    %1534 = vmatpush1.msra.mxu0 0.0
    %1535 = vmatprep.subr.mxu0 0.0
    %1536 = vmatpush1.msra.mxu0 0.0
    %1537 = vmatprep.subr.mxu0 0.0
    %1538 = vmatpush1.msra.mxu0 0.0
    %1539 = vmatprep.subr.mxu0 0.0
    %1540 = vmatpush1.msra.mxu0 0.0
    %1541 = vmatprep.subr.mxu0 0.0
    %1542 = vmatpush1.msra.mxu0 0.0
    %1543 = vmatprep.subr.mxu0 0.0
    %1544 = vmatpush1.msra.mxu0 0.0
    %1545 = vmatprep.subr.mxu0 0.0
    %1546 = vmatpush1.msra.mxu0 0.0
    %1547 = vmatprep.subr.mxu0 0.0
    %1548 = vmatpush1.msra.mxu0 0.0
    %1549 = vmatprep.mubr.f32.mxu0 0.0
    %1550 = vmatmul.mubr.f32.gmra.mrb[0].mxu0 %v1463
    %v1551 = vpop.f32.mrb[0].mxu0
    %v1552 = vadd.f32 %v1484, %v1551
    %v1553 = vpop.f32.mrb[0].mxu0
    %1554 = vmatprep.mubr.f32.mxu0 0.0
    %1555 = vmatmul.mubr.f32.gmra.mrb[0].mxu0 %v1464
    %v1556 = vpop.f32.mrb[0].mxu0
    %v1557 = vadd.f32 %v1484, %v1556
    %v1558 = vpop.f32.mrb[0].mxu0
    %1559 = vdwg.mxu0
    %v1560 = vadd.f32 %v1326, %v1552
    %v1561 = vadd.f32 %v1327, %v1557
    %1562 = vst.msk [vmem:[#allocation2] sm:$0xff] %vm32, %v1560
    %1563 = vst.msk [vmem:[#allocation2 + $0x8] sm:$0xff] %vm32, %v1561
    // Predicated region
    $region22: #{tpu_custom_call.1} parent=1 // pred_check
      _
    $region23: #{tpu_custom_call.1} parent=1 // pred_check_branch
      %1565 = sbr.rel (0) target = $region25
    $region24: #{tpu_custom_call.1} parent=1 // pred_region
      %s1567 = ssub.s32 256, 256
      %1568 = vsyncadd [#allocation3], %s1567
      %s1569 = sshll.u32 [#allocation2], 4
      %s1570 = int_to_ptr.vmem [resolvable:$true] %s1569
      %1575 = dma.vmem_to_hbm [thread:$0]  %s1570, 256, %s5, [#allocation3], 128, 128, 8
    $region25: #{tpu_custom_call.1} parent=1 // pred_fallthru
      _
    // Predicated region
    $region26: #{tpu_custom_call.1} parent=1 // pred_check
      _
    $region27: #{tpu_custom_call.1} parent=1 // pred_check_branch
      %1577 = sbr.rel (0) target = $region29
    $region28: #{tpu_custom_call.1} parent=1 // pred_region
      %1578 = dma.done [#allocation3], 256
    $region29: #{tpu_custom_call.1} parent=1 // pred_fallthru
      _
    %1579 = vsyncpa [#allocation3], 1

</llo_original>
